<compile_context>
chip_gen: v5e
topology: v5e:2x2
jax: 0.10.0
libtpu: 0.0.40
codegen_flags: <defaults>
</compile_context>

<pallas_src>
import functools

import jax
import jax.numpy as jnp
from jax.experimental import pallas as pl
from jax.experimental.pallas import tpu as pltpu


def _pick_row_chunk(h, w, target_rows=512):
    # Largest divisor of h whose flattened row count (rc*w) stays <= target.
    best = 1
    for rc in range(1, h + 1):
        if h % rc == 0 and rc * w <= max(target_rows, w):
            best = rc
    return best


def _ssd_head_kernel(x_ref, w_ref, b_ref, out_ref, xpad_ref):
    # x_ref:    (B, H, W, Cin)        bf16, unpadded NHWC input tile
    # w_ref:    (9, Cin, Cout_pad)    bf16, fused loc+cls weights, one plane per tap
    # b_ref:    (1, Cout_pad)         f32, fused bias (zero in the pad lanes)
    # out_ref:  (B, H, W, Cout_pad)   bf16
    # xpad_ref: (B, H+2, W+2, Cin)    bf16 VMEM scratch (spatially padded copy)
    B, H, W, Cin = x_ref.shape
    Cout_pad = out_ref.shape[3]

    # ---- spatial padding: zero ONLY the 1-wide halo, then write the interior.
    zrow = jnp.zeros((B, 1, W + 2, Cin), dtype=xpad_ref.dtype)
    xpad_ref[:, 0:1, :, :] = zrow
    xpad_ref[:, H + 1:H + 2, :, :] = zrow
    zcol = jnp.zeros((B, H, 1, Cin), dtype=xpad_ref.dtype)
    xpad_ref[:, 1:H + 1, 0:1, :] = zcol
    xpad_ref[:, 1:H + 1, W + 1:W + 2, :] = zcol
    xpad_ref[:, 1:H + 1, 1:W + 1, :] = x_ref[...]

    bias = b_ref[...]  # (1, Cout_pad) f32, broadcast over rows

    # ---- conv as 9 accumulating matmuls, chunked over output rows so the f32
    # accumulator stays small (no im2col buffer, no full-size f32 value).
    rc = _pick_row_chunk(H, W)          # static (shapes are trace-time ints)
    n_chunks = H // rc
    m = rc * W
    for b in range(B):
        for c in range(n_chunks):
            r0 = c * rc
            acc = jnp.zeros((m, Cout_pad), jnp.float32)
            for k in range(9):
                ky, kx = k // 3, k % 3
                # Tap window read directly from the padded scratch -> MXU.
                xt = xpad_ref[b:b + 1, ky + r0:ky + r0 + rc,
                              kx:kx + W, :].reshape(m, Cin)
                acc = acc + jnp.dot(xt, w_ref[k],
                                    preferred_element_type=jnp.float32)
            acc = acc + bias
            out_ref[b:b + 1, r0:r0 + rc, :, :] = acc.reshape(
                1, rc, W, Cout_pad).astype(out_ref.dtype)


def _round_up(x, m):
    return ((x + m - 1) // m) * m


def _pick_batch_tile(n, hw, target_m=1024):
    # Largest divisor of n with flattened rows near target_m, while keeping the
    # grid length >= 2 so both v7x TensorCores get work.
    max_bt = n if n < 2 else n // 2
    best = 1
    for bt in range(1, max_bt + 1):
        if n % bt == 0 and bt * hw <= max(target_m, hw):
            best = bt
    return best


def _vmem_capacity_bytes():
    try:
        return int(pltpu.get_tpu_info().vmem_capacity_bytes)
    except Exception:
        return 64 * 1024 * 1024  # conservative (v7x per-core VMEM)


def _vmem_estimate(b, h, w, cin, cout_pad):
    # Per-step VMEM estimate with lane/sublane rounding.  Input/output/weights
    # are double-buffered by the pipeline; the padded scratch is single.
    def tile_bytes(shape, itemsize, sublane):
        s = list(shape)
        s[-1] = _round_up(s[-1], 128)
        s[-2] = _round_up(s[-2], sublane)
        num = 1
        for d in s:
            num *= d
        return num * itemsize

    est = 0
    est += 2 * tile_bytes((b, h, w, cin), 2, 16)        # bf16 input (x2 bufs)
    est += 2 * tile_bytes((b, h, w, cout_pad), 2, 16)   # bf16 output (x2 bufs)
    est += 2 * tile_bytes((9, cin, cout_pad), 2, 16)    # fused weights
    est += 2 * tile_bytes((1, cout_pad), 4, 8)          # fused bias (f32)
    est += tile_bytes((b, h + 2, w + 2, cin), 2, 16)    # padded-input scratch
    return est


def ssd_head_forward(x_nchw, w_loc, b_loc, w_cls, b_cls, num_classes):
    """x_nchw: (N, Cin, H, W) f32.  Weights in PyTorch conv layout:
    w_loc: (Cl, Cin, 3, 3), b_loc: (Cl,); w_cls: (Cc, Cin, 3, 3), b_cls: (Cc,).
    Returns (loc_preds (N, -1, 4), class_preds (N, -1, num_classes))."""
    N, Cin, H, W = x_nchw.shape
    Cl = w_loc.shape[0]
    Cc = w_cls.shape[0]
    Cout = Cl + Cc
    Cout_pad = _round_up(Cout, 128)

    # One fused XLA pass: NCHW -> NHWC + bf16 cast (see TODO at top of file).
    x_nhwc = jnp.transpose(x_nchw, (0, 2, 3, 1)).astype(jnp.bfloat16)

    # (Cout, Cin, 3, 3) -> (3, 3, Cin, Cout) -> (9, Cin, Cout); tap index is
    # ky*3 + kx, matching the in-kernel tap loop.  Fuse both heads and zero-pad
    # the output channels up to a multiple of 128 lanes (lane-dense stores).
    wl = jnp.transpose(w_loc, (2, 3, 1, 0)).reshape(9, Cin, Cl)
    wc = jnp.transpose(w_cls, (2, 3, 1, 0)).reshape(9, Cin, Cc)
    w_fused = jnp.concatenate([wl, wc], axis=2)
    b_fused = jnp.concatenate([b_loc, b_cls], axis=0)
    if Cout_pad != Cout:
        w_fused = jnp.pad(w_fused, ((0, 0), (0, 0), (0, Cout_pad - Cout)))
        b_fused = jnp.pad(b_fused, (0, Cout_pad - Cout))
    w_fused = w_fused.astype(jnp.bfloat16)
    b_fused = b_fused.reshape(1, Cout_pad).astype(jnp.float32)

    B_tile = _pick_batch_tile(N, H * W)
    grid = (N // B_tile,)

    vmem_need = _vmem_estimate(B_tile, H, W, Cin, Cout_pad)
    vmem_limit = int(min(max(vmem_need, 16 * 1024 * 1024),
                         int(0.8 * _vmem_capacity_bytes())))

    flops = 2 * N * H * W * 9 * Cin * Cout_pad
    bytes_accessed = (x_nhwc.size * 2 + N * H * W * Cout_pad * 2
                      + w_fused.size * 2 + b_fused.size * 4)

    out = pl.pallas_call(
        _ssd_head_kernel,
        out_shape=jax.ShapeDtypeStruct((N, H, W, Cout_pad), jnp.bfloat16),
        grid_spec=pltpu.PrefetchScalarGridSpec(
            num_scalar_prefetch=0,
            grid=grid,
            in_specs=[
                pl.BlockSpec((B_tile, H, W, Cin), lambda n: (n, 0, 0, 0)),
                # Grid-invariant weights / bias: constant index_map => fetched
                # once and kept resident in VMEM across grid steps.
                pl.BlockSpec((9, Cin, Cout_pad), lambda n: (0, 0, 0)),
                pl.BlockSpec((1, Cout_pad), lambda n: (0, 0)),
            ],
            out_specs=pl.BlockSpec((B_tile, H, W, Cout_pad),
                                   lambda n: (n, 0, 0, 0)),
            scratch_shapes=[
                pltpu.VMEM((B_tile, H + 2, W + 2, Cin), jnp.bfloat16),
            ],
        ),
        compiler_params=pltpu.CompilerParams(
            dimension_semantics=("parallel",),
            vmem_limit_bytes=vmem_limit),
        cost_estimate=pl.CostEstimate(flops=flops, transcendentals=0,
                                      bytes_accessed=bytes_accessed),
    )(x_nhwc, w_fused, b_fused)

    # Matches PyTorch: permute(0,2,3,1).contiguous().view(N, -1, 4/num_classes).
    # Each head: one fused slice+reshape+f32-cast pass over the bf16 output.
    loc_preds = out[..., :Cl].reshape(N, -1, 4).astype(jnp.float32)
    class_preds = out[..., Cl:Cl + Cc].reshape(
        N, -1, num_classes).astype(jnp.float32)
    return loc_preds, class_preds


def _reference(x_nchw, w, b):
    # Plain-JAX reference conv (NCHW, 3x3, pad=1) for correctness check.
    out = jax.lax.conv_general_dilated(
        x_nchw, w, window_strides=(1, 1), padding=((1, 1), (1, 1)),
        dimension_numbers=("NCHW", "OIHW", "NCHW"))
    return out + b[None, :, None, None]


if __name__ == "__main__":
    # Small, SSD-consistent synthetic shapes.
    num_classes = 4
    num_priors = 8           # priors-per-location (scaled down from 8732 total)
    input_channels = 16
    N, H, W = 2, 8, 8
    Cl = num_priors * 4            # 32
    Cc = num_priors * num_classes  # 32

    key = jax.random.PRNGKey(0)
    kx, kwl, kbl, kwc, kbc = jax.random.split(key, 5)
    x = jax.random.normal(kx, (N, input_channels, H, W), jnp.float32)
    w_loc = jax.random.normal(kwl, (Cl, input_channels, 3, 3), jnp.float32) * 0.05
    b_loc = jax.random.normal(kbl, (Cl,), jnp.float32) * 0.05
    w_cls = jax.random.normal(kwc, (Cc, input_channels, 3, 3), jnp.float32) * 0.05
    b_cls = jax.random.normal(kbc, (Cc,), jnp.float32) * 0.05

    loc_preds, class_preds = jax.jit(
        functools.partial(ssd_head_forward, num_classes=num_classes)
    )(x, w_loc, b_loc, w_cls, b_cls)
    jax.block_until_ready((loc_preds, class_preds))

    # Reference (same permute/view semantics), computed on bf16-rounded inputs
    # to match the bf16 MXU matmul (f32 accumulate) inside the kernel.
    def _r(a):
        return a.astype(jnp.bfloat16).astype(jnp.float32)

    ref_loc = jnp.transpose(_reference(_r(x), _r(w_loc), b_loc),
                            (0, 2, 3, 1)).reshape(N, -1, 4)
    ref_cls = jnp.transpose(_reference(_r(x), _r(w_cls), b_cls),
                            (0, 2, 3, 1)).reshape(N, -1, num_classes)

    assert loc_preds.shape == (N, H * W * num_priors, 4)
    assert class_preds.shape == (N, H * W * num_priors, num_classes)
    assert jnp.allclose(loc_preds, ref_loc, atol=1e-2, rtol=1e-2)
    assert jnp.allclose(class_preds, ref_cls, atol=1e-2, rtol=1e-2)

    print("KERNEL_OK")
</pallas_src>

<mosaic_0001>
module attributes {stable_mosaic.version = 11 : i64} {
  func.func @_ssd_head_kernel(%arg0: i32, %arg1: memref<1x8x8x16xbf16, #tpu.memory_space<vmem>>, %arg2: memref<9x16x128xbf16, #tpu.memory_space<vmem>>, %arg3: memref<1x128xf32, #tpu.memory_space<vmem>>, %arg4: memref<1x8x8x128xbf16, #tpu.memory_space<vmem>>, %arg5: memref<1x10x10x16xbf16, #tpu.memory_space<vmem>>) attributes {dimension_semantics = [#tpu.dimension_semantics<parallel>], iteration_bounds = array<i64: 2>, scalar_prefetch = 0 : i64, scratch_operands = 1 : i64, tpu.core_type = #tpu.core_type<tc>, window_params = [{transform_indices = @transform_0, window_bounds = array<i64: 1, 8, 8, 16>}, {pipeline_mode = #tpu.pipeline_mode<synchronous>, transform_indices = @transform_1, window_bounds = array<i64: 9, 16, 128>}, {pipeline_mode = #tpu.pipeline_mode<synchronous>, transform_indices = @transform_2, window_bounds = array<i64: 1, 128>}, {transform_indices = @transform_3, window_bounds = array<i64: 1, 8, 8, 128>}]} {
    %cst = arith.constant 0.000000e+00 : bf16
    %0 = vector.broadcast %cst : bf16 to vector<1x1x10x16xbf16>
    %c0 = arith.constant 0 : index
    %c0_0 = arith.constant 0 : index
    %c0_1 = arith.constant 0 : index
    %c0_2 = arith.constant 0 : index
    %1 = vector.load %arg5[%c0, %c0_0, %c0_1, %c0_2] : memref<1x10x10x16xbf16, #tpu.memory_space<vmem>>, vector<1x1x10x16xbf16>
    tpu.vector_store %arg5[%c0, %c0_0, %c0_1, %c0_2], %0 {strides = array<i32>} : memref<1x10x10x16xbf16, #tpu.memory_space<vmem>>, vector<1x1x10x16xbf16>,
    %c0_3 = arith.constant 0 : index
    %c9 = arith.constant 9 : index
    %c0_4 = arith.constant 0 : index
    %c0_5 = arith.constant 0 : index
    %2 = vector.load %arg5[%c0_3, %c9, %c0_4, %c0_5] : memref<1x10x10x16xbf16, #tpu.memory_space<vmem>>, vector<1x1x10x16xbf16>
    tpu.vector_store %arg5[%c0_3, %c9, %c0_4, %c0_5], %0 {strides = array<i32>} : memref<1x10x10x16xbf16, #tpu.memory_space<vmem>>, vector<1x1x10x16xbf16>,
    %cst_6 = arith.constant 0.000000e+00 : bf16
    %3 = vector.broadcast %cst_6 : bf16 to vector<1x8x1x16xbf16>
    %c0_7 = arith.constant 0 : index
    %c1 = arith.constant 1 : index
    %c0_8 = arith.constant 0 : index
    %c0_9 = arith.constant 0 : index
    %4 = vector.load %arg5[%c0_7, %c1, %c0_8, %c0_9] : memref<1x10x10x16xbf16, #tpu.memory_space<vmem>>, vector<1x8x1x16xbf16>
    tpu.vector_store %arg5[%c0_7, %c1, %c0_8, %c0_9], %3 {strides = array<i32>} : memref<1x10x10x16xbf16, #tpu.memory_space<vmem>>, vector<1x8x1x16xbf16>,
    %c0_10 = arith.constant 0 : index
    %c1_11 = arith.constant 1 : index
    %c9_12 = arith.constant 9 : index
    %c0_13 = arith.constant 0 : index
    %5 = vector.load %arg5[%c0_10, %c1_11, %c9_12, %c0_13] : memref<1x10x10x16xbf16, #tpu.memory_space<vmem>>, vector<1x8x1x16xbf16>
    tpu.vector_store %arg5[%c0_10, %c1_11, %c9_12, %c0_13], %3 {strides = array<i32>} : memref<1x10x10x16xbf16, #tpu.memory_space<vmem>>, vector<1x8x1x16xbf16>,
    %c0_14 = arith.constant 0 : index
    %c0_15 = arith.constant 0 : index
    %c0_16 = arith.constant 0 : index
    %c0_17 = arith.constant 0 : index
    %6 = vector.load %arg1[%c0_14, %c0_15, %c0_16, %c0_17] : memref<1x8x8x16xbf16, #tpu.memory_space<vmem>>, vector<1x8x8x16xbf16>
    %c0_18 = arith.constant 0 : index
    %c1_19 = arith.constant 1 : index
    %c1_20 = arith.constant 1 : index
    %c0_21 = arith.constant 0 : index
    %7 = vector.load %arg5[%c0_18, %c1_19, %c1_20, %c0_21] : memref<1x10x10x16xbf16, #tpu.memory_space<vmem>>, vector<1x8x8x16xbf16>
    tpu.vector_store %arg5[%c0_18, %c1_19, %c1_20, %c0_21], %6 {strides = array<i32>} : memref<1x10x10x16xbf16, #tpu.memory_space<vmem>>, vector<1x8x8x16xbf16>,
    %c0_22 = arith.constant 0 : index
    %c0_23 = arith.constant 0 : index
    %8 = vector.load %arg3[%c0_22, %c0_23] : memref<1x128xf32, #tpu.memory_space<vmem>>, vector<1x128xf32>
    %cst_24 = arith.constant 0.000000e+00 : f32
    %9 = vector.broadcast %cst_24 : f32 to vector<64x128xf32>
    %c0_25 = arith.constant 0 : index
    %c0_26 = arith.constant 0 : index
    %c0_27 = arith.constant 0 : index
    %c0_28 = arith.constant 0 : index
    %10 = vector.load %arg5[%c0_25, %c0_26, %c0_27, %c0_28] : memref<1x10x10x16xbf16, #tpu.memory_space<vmem>>, vector<1x8x8x16xbf16>
    %11 = vector.shape_cast %10 : vector<1x8x8x16xbf16> to vector<64x16xbf16>
    %c0_29 = arith.constant 0 : index
    %c0_30 = arith.constant 0 : index
    %c0_31 = arith.constant 0 : index
    %12 = vector.load %arg2[%c0_29, %c0_30, %c0_31] : memref<9x16x128xbf16, #tpu.memory_space<vmem>>, vector<1x16x128xbf16>
    %13 = vector.shape_cast %12 : vector<1x16x128xbf16> to vector<16x128xbf16>
    %cst_32 = arith.constant dense<0.000000e+00> : vector<64x128xf32>
    %14 = tpu.matmul %11, %13, %cst_32 {dimension_numbers = #tpu.dot_dimension_numbers<[1], [0], [0], [1], [0, 0, 1, 1], [], []>} : vector<64x16xbf16>, vector<16x128xbf16>, vector<64x128xf32> -> vector<64x128xf32>
    %15 = arith.addf %9, %14 : vector<64x128xf32>
    %c0_33 = arith.constant 0 : index
    %c0_34 = arith.constant 0 : index
    %c1_35 = arith.constant 1 : index
    %c0_36 = arith.constant 0 : index
    %16 = vector.load %arg5[%c0_33, %c0_34, %c1_35, %c0_36] : memref<1x10x10x16xbf16, #tpu.memory_space<vmem>>, vector<1x8x8x16xbf16>
    %17 = vector.shape_cast %16 : vector<1x8x8x16xbf16> to vector<64x16xbf16>
    %c1_37 = arith.constant 1 : index
    %c0_38 = arith.constant 0 : index
    %c0_39 = arith.constant 0 : index
    %18 = vector.load %arg2[%c1_37, %c0_38, %c0_39] : memref<9x16x128xbf16, #tpu.memory_space<vmem>>, vector<1x16x128xbf16>
    %19 = vector.shape_cast %18 : vector<1x16x128xbf16> to vector<16x128xbf16>
    %cst_40 = arith.constant dense<0.000000e+00> : vector<64x128xf32>
    %20 = tpu.matmul %17, %19, %cst_40 {dimension_numbers = #tpu.dot_dimension_numbers<[1], [0], [0], [1], [0, 0, 1, 1], [], []>} : vector<64x16xbf16>, vector<16x128xbf16>, vector<64x128xf32> -> vector<64x128xf32>
    %21 = arith.addf %15, %20 : vector<64x128xf32>
    %c0_41 = arith.constant 0 : index
    %c0_42 = arith.constant 0 : index
    %c2 = arith.constant 2 : index
    %c0_43 = arith.constant 0 : index
    %22 = vector.load %arg5[%c0_41, %c0_42, %c2, %c0_43] : memref<1x10x10x16xbf16, #tpu.memory_space<vmem>>, vector<1x8x8x16xbf16>
    %23 = vector.shape_cast %22 : vector<1x8x8x16xbf16> to vector<64x16xbf16>
    %c2_44 = arith.constant 2 : index
    %c0_45 = arith.constant 0 : index
    %c0_46 = arith.constant 0 : index
    %24 = vector.load %arg2[%c2_44, %c0_45, %c0_46] : memref<9x16x128xbf16, #tpu.memory_space<vmem>>, vector<1x16x128xbf16>
    %25 = vector.shape_cast %24 : vector<1x16x128xbf16> to vector<16x128xbf16>
    %cst_47 = arith.constant dense<0.000000e+00> : vector<64x128xf32>
    %26 = tpu.matmul %23, %25, %cst_47 {dimension_numbers = #tpu.dot_dimension_numbers<[1], [0], [0], [1], [0, 0, 1, 1], [], []>} : vector<64x16xbf16>, vector<16x128xbf16>, vector<64x128xf32> -> vector<64x128xf32>
    %27 = arith.addf %21, %26 : vector<64x128xf32>
    %c0_48 = arith.constant 0 : index
    %c1_49 = arith.constant 1 : index
    %c0_50 = arith.constant 0 : index
    %c0_51 = arith.constant 0 : index
    %28 = vector.load %arg5[%c0_48, %c1_49, %c0_50, %c0_51] : memref<1x10x10x16xbf16, #tpu.memory_space<vmem>>, vector<1x8x8x16xbf16>
    %29 = vector.shape_cast %28 : vector<1x8x8x16xbf16> to vector<64x16xbf16>
    %c3 = arith.constant 3 : index
    %c0_52 = arith.constant 0 : index
    %c0_53 = arith.constant 0 : index
    %30 = vector.load %arg2[%c3, %c0_52, %c0_53] : memref<9x16x128xbf16, #tpu.memory_space<vmem>>, vector<1x16x128xbf16>
    %31 = vector.shape_cast %30 : vector<1x16x128xbf16> to vector<16x128xbf16>
    %cst_54 = arith.constant dense<0.000000e+00> : vector<64x128xf32>
    %32 = tpu.matmul %29, %31, %cst_54 {dimension_numbers = #tpu.dot_dimension_numbers<[1], [0], [0], [1], [0, 0, 1, 1], [], []>} : vector<64x16xbf16>, vector<16x128xbf16>, vector<64x128xf32> -> vector<64x128xf32>
    %33 = arith.addf %27, %32 : vector<64x128xf32>
    %c0_55 = arith.constant 0 : index
    %c1_56 = arith.constant 1 : index
    %c1_57 = arith.constant 1 : index
    %c0_58 = arith.constant 0 : index
    %34 = vector.load %arg5[%c0_55, %c1_56, %c1_57, %c0_58] : memref<1x10x10x16xbf16, #tpu.memory_space<vmem>>, vector<1x8x8x16xbf16>
    %35 = vector.shape_cast %34 : vector<1x8x8x16xbf16> to vector<64x16xbf16>
    %c4 = arith.constant 4 : index
    %c0_59 = arith.constant 0 : index
    %c0_60 = arith.constant 0 : index
    %36 = vector.load %arg2[%c4, %c0_59, %c0_60] : memref<9x16x128xbf16, #tpu.memory_space<vmem>>, vector<1x16x128xbf16>
    %37 = vector.shape_cast %36 : vector<1x16x128xbf16> to vector<16x128xbf16>
    %cst_61 = arith.constant dense<0.000000e+00> : vector<64x128xf32>
    %38 = tpu.matmul %35, %37, %cst_61 {dimension_numbers = #tpu.dot_dimension_numbers<[1], [0], [0], [1], [0, 0, 1, 1], [], []>} : vector<64x16xbf16>, vector<16x128xbf16>, vector<64x128xf32> -> vector<64x128xf32>
    %39 = arith.addf %33, %38 : vector<64x128xf32>
    %c0_62 = arith.constant 0 : index
    %c1_63 = arith.constant 1 : index
    %c2_64 = arith.constant 2 : index
    %c0_65 = arith.constant 0 : index
    %40 = vector.load %arg5[%c0_62, %c1_63, %c2_64, %c0_65] : memref<1x10x10x16xbf16, #tpu.memory_space<vmem>>, vector<1x8x8x16xbf16>
    %41 = vector.shape_cast %40 : vector<1x8x8x16xbf16> to vector<64x16xbf16>
    %c5 = arith.constant 5 : index
    %c0_66 = arith.constant 0 : index
    %c0_67 = arith.constant 0 : index
    %42 = vector.load %arg2[%c5, %c0_66, %c0_67] : memref<9x16x128xbf16, #tpu.memory_space<vmem>>, vector<1x16x128xbf16>
    %43 = vector.shape_cast %42 : vector<1x16x128xbf16> to vector<16x128xbf16>
    %cst_68 = arith.constant dense<0.000000e+00> : vector<64x128xf32>
    %44 = tpu.matmul %41, %43, %cst_68 {dimension_numbers = #tpu.dot_dimension_numbers<[1], [0], [0], [1], [0, 0, 1, 1], [], []>} : vector<64x16xbf16>, vector<16x128xbf16>, vector<64x128xf32> -> vector<64x128xf32>
    %45 = arith.addf %39, %44 : vector<64x128xf32>
    %c0_69 = arith.constant 0 : index
    %c2_70 = arith.constant 2 : index
    %c0_71 = arith.constant 0 : index
    %c0_72 = arith.constant 0 : index
    %46 = vector.load %arg5[%c0_69, %c2_70, %c0_71, %c0_72] : memref<1x10x10x16xbf16, #tpu.memory_space<vmem>>, vector<1x8x8x16xbf16>
    %47 = vector.shape_cast %46 : vector<1x8x8x16xbf16> to vector<64x16xbf16>
    %c6 = arith.constant 6 : index
    %c0_73 = arith.constant 0 : index
    %c0_74 = arith.constant 0 : index
    %48 = vector.load %arg2[%c6, %c0_73, %c0_74] : memref<9x16x128xbf16, #tpu.memory_space<vmem>>, vector<1x16x128xbf16>
    %49 = vector.shape_cast %48 : vector<1x16x128xbf16> to vector<16x128xbf16>
    %cst_75 = arith.constant dense<0.000000e+00> : vector<64x128xf32>
    %50 = tpu.matmul %47, %49, %cst_75 {dimension_numbers = #tpu.dot_dimension_numbers<[1], [0], [0], [1], [0, 0, 1, 1], [], []>} : vector<64x16xbf16>, vector<16x128xbf16>, vector<64x128xf32> -> vector<64x128xf32>
    %51 = arith.addf %45, %50 : vector<64x128xf32>
    %c0_76 = arith.constant 0 : index
    %c2_77 = arith.constant 2 : index
    %c1_78 = arith.constant 1 : index
    %c0_79 = arith.constant 0 : index
    %52 = vector.load %arg5[%c0_76, %c2_77, %c1_78, %c0_79] : memref<1x10x10x16xbf16, #tpu.memory_space<vmem>>, vector<1x8x8x16xbf16>
    %53 = vector.shape_cast %52 : vector<1x8x8x16xbf16> to vector<64x16xbf16>
    %c7 = arith.constant 7 : index
    %c0_80 = arith.constant 0 : index
    %c0_81 = arith.constant 0 : index
    %54 = vector.load %arg2[%c7, %c0_80, %c0_81] : memref<9x16x128xbf16, #tpu.memory_space<vmem>>, vector<1x16x128xbf16>
    %55 = vector.shape_cast %54 : vector<1x16x128xbf16> to vector<16x128xbf16>
    %cst_82 = arith.constant dense<0.000000e+00> : vector<64x128xf32>
    %56 = tpu.matmul %53, %55, %cst_82 {dimension_numbers = #tpu.dot_dimension_numbers<[1], [0], [0], [1], [0, 0, 1, 1], [], []>} : vector<64x16xbf16>, vector<16x128xbf16>, vector<64x128xf32> -> vector<64x128xf32>
    %57 = arith.addf %51, %56 : vector<64x128xf32>
    %c0_83 = arith.constant 0 : index
    %c2_84 = arith.constant 2 : index
    %c2_85 = arith.constant 2 : index
    %c0_86 = arith.constant 0 : index
    %58 = vector.load %arg5[%c0_83, %c2_84, %c2_85, %c0_86] : memref<1x10x10x16xbf16, #tpu.memory_space<vmem>>, vector<1x8x8x16xbf16>
    %59 = vector.shape_cast %58 : vector<1x8x8x16xbf16> to vector<64x16xbf16>
    %c8 = arith.constant 8 : index
    %c0_87 = arith.constant 0 : index
    %c0_88 = arith.constant 0 : index
    %60 = vector.load %arg2[%c8, %c0_87, %c0_88] : memref<9x16x128xbf16, #tpu.memory_space<vmem>>, vector<1x16x128xbf16>
    %61 = vector.shape_cast %60 : vector<1x16x128xbf16> to vector<16x128xbf16>
    %cst_89 = arith.constant dense<0.000000e+00> : vector<64x128xf32>
    %62 = tpu.matmul %59, %61, %cst_89 {dimension_numbers = #tpu.dot_dimension_numbers<[1], [0], [0], [1], [0, 0, 1, 1], [], []>} : vector<64x16xbf16>, vector<16x128xbf16>, vector<64x128xf32> -> vector<64x128xf32>
    %63 = arith.addf %57, %62 : vector<64x128xf32>
    %64 = vector.broadcast %8 : vector<1x128xf32> to vector<64x128xf32>
    %65 = arith.addf %63, %64 : vector<64x128xf32>
    %66 = vector.shape_cast %65 : vector<64x128xf32> to vector<1x8x8x128xf32>
    %67 = arith.truncf %66 : vector<1x8x8x128xf32> to vector<1x8x8x128xbf16>
    %c0_90 = arith.constant 0 : index
    %c0_91 = arith.constant 0 : index
    %c0_92 = arith.constant 0 : index
    %c0_93 = arith.constant 0 : index
    %68 = vector.load %arg4[%c0_90, %c0_91, %c0_92, %c0_93] : memref<1x8x8x128xbf16, #tpu.memory_space<vmem>>, vector<1x8x8x128xbf16>
    tpu.vector_store %arg4[%c0_90, %c0_91, %c0_92, %c0_93], %67 {strides = array<i32>} : memref<1x8x8x128xbf16, #tpu.memory_space<vmem>>, vector<1x8x8x128xbf16>,
    return
  }
  func.func @transform_0(%arg0: i32) -> (i32, i32, i32, i32) {
    %c0_i32 = arith.constant 0 : i32
    %c0_i32_0 = arith.constant 0 : i32
    %c0_i32_1 = arith.constant 0 : i32
    %c0_i32_2 = arith.constant 0 : i32
    return %arg0, %c0_i32, %c0_i32_0, %c0_i32_1 : i32, i32, i32, i32
  }
  func.func @transform_1(%arg0: i32) -> (i32, i32, i32) {
    %c0_i32 = arith.constant 0 : i32
    %c0_i32_0 = arith.constant 0 : i32
    %c0_i32_1 = arith.constant 0 : i32
    %c0_i32_2 = arith.constant 0 : i32
    return %c0_i32, %c0_i32_0, %c0_i32_1 : i32, i32, i32
  }
  func.func @transform_2(%arg0: i32) -> (i32, i32) {
    %c0_i32 = arith.constant 0 : i32
    %c0_i32_0 = arith.constant 0 : i32
    %c0_i32_1 = arith.constant 0 : i32
    return %c0_i32, %c0_i32_0 : i32, i32
  }
  func.func @transform_3(%arg0: i32) -> (i32, i32, i32, i32) {
    %c0_i32 = arith.constant 0 : i32
    %c0_i32_0 = arith.constant 0 : i32
    %c0_i32_1 = arith.constant 0 : i32
    %c0_i32_2 = arith.constant 0 : i32
    return %arg0, %c0_i32, %c0_i32_0, %c0_i32_1 : i32, i32, i32, i32
  }
}

</mosaic_0001>

<llo_original>
// kernel: ssd_head_forward.1
$region0: #{ssd_head_forward.1}
  #allocation0 [shape = 'u32[]', space=smem, size = 0x4, offset = 0x4, fixed_abs, tag = 'smem constant byte address 0x4 - core index']
  #allocation1 [shape = 'u32[72,128]{1,0:T(1,128)}', space=vmem, size = 0x9000, scoped, tag = 'internal scratch']
  #allocation2 [shape = 'bf16[1,10,10,16]{3,2,1,0:T(8,128)(2,1)}', space=vmem, size = 0xa000, scoped, tag = 'scratch operand']
  %s0 = inlined_call_operand.vmem [shape: bf16[2,8,8,16], index: 0, kind: input, shape index: {}]
  %s1 = inlined_call_operand.vmem [shape: bf16[9,16,128], index: 1, kind: input, shape index: {}]
  %s2 = inlined_call_operand.vmem [shape: f32[1,128], index: 2, kind: input, shape index: {}]
  %s3 = inlined_call_operand.vmem [shape: bf16[2,8,8,128], index: 3, kind: output, shape index: {}]
  %s4 = sld [smem:[#allocation0]]
  $region45: #{ssd_head_forward.1} parent=0
    _
  %s6 = ssub.s32 1, %s4
  %s7 = scalar_select 0, %s6, %s4
  loop: start=0, step=1, limit=4
  $region2: #{ssd_head_forward.1} parent=0 // loop_pre_header
    _
  $region3: #{ssd_head_forward.1} parent=0 // loop_header
    %s9 = sphi 0, %s13
    %p10 = scmp.ge.s32.totalorder %s9, 4
    %s19 = sphi 0, %s21
    %s22 = sphi 0, %s19
    %s23 = sphi 0, %s22
    %s39 = sphi 0, %s23
    %s43 = sphi 0, %s43
    %s45 = sphi 0, %s43
    %s46 = sphi 0, %s45
    %s60 = sphi 0, %s46
    %s64 = sphi 0, %s64
    %s66 = sphi 0, %s64
    %s67 = sphi 0, %s66
    %s81 = sphi 0, %s67
    %s87 = sphi 0, %s89
    %s90 = sphi 0, %s87
    %s91 = sphi 0, %s90
    %s107 = sphi 0, %s91
  $region4: #{ssd_head_forward.1} parent=0 // loop_header_branch
    %12 = sbr.rel (%p10) target = $region8
  $region5: #{ssd_head_forward.1} parent=0 // loop_body
    %s14 = ssub.s32 %s9, 1
    %s15 = ssub.s32 %s9, 2
    %s16 = sadd.s32 %s9, 1
    %s17 = ssub.s32 %s9, %s16
    %p18 = scmp.eq.s32.totalorder %s17, 0
    %s20 = sadd.s32 %s19, 1
    %s21 = scalar_select %p18, %s19, %s20
    %p24 = pneg %p18
    %p25 = scmp.eq.s32.totalorder %s9, 1
    %p26 = por %p24, %p25
    %p27 = scmp.ne.s32.totalorder %s19, %s22
    %p28 = scmp.eq.s32.totalorder %s9, 0
    %p29 = por %p27, %p28
    %p30 = scmp.ne.s32.totalorder %s19, %s22
    %p31 = scmp.eq.s32.totalorder %s14, 1
    %p32 = por %p30, %p31
    %p33 = scmp.ne.s32.totalorder %s22, %s23
    %p34 = scmp.eq.s32.totalorder %s14, 0
    %p35 = por %p33, %p34
    %p36 = scmp.ne.s32.totalorder %s22, %s23
    %p37 = scmp.eq.s32.totalorder %s15, 1
    %p38 = por %p36, %p37
    %p40 = scmp.ne.s32.totalorder %s23, %s39
    %p41 = scmp.eq.s32.totalorder %s15, 0
    %p42 = por %p40, %p41
    %s44 = sadd.s32 %s43, 1
    %p47 = scmp.eq.s32.totalorder %s9, 1
    %p48 = scmp.ne.s32.totalorder %s43, %s45
    %p49 = scmp.eq.s32.totalorder %s9, 0
    %p50 = por %p48, %p49
    %p51 = scmp.ne.s32.totalorder %s43, %s45
    %p52 = scmp.eq.s32.totalorder %s14, 1
    %p53 = por %p51, %p52
    %p54 = scmp.ne.s32.totalorder %s45, %s46
    %p55 = scmp.eq.s32.totalorder %s14, 0
    %p56 = por %p54, %p55
    %p57 = scmp.ne.s32.totalorder %s45, %s46
    %p58 = scmp.eq.s32.totalorder %s15, 1
    %p59 = por %p57, %p58
    %p61 = scmp.ne.s32.totalorder %s46, %s60
    %p62 = scmp.eq.s32.totalorder %s15, 0
    %p63 = por %p61, %p62
    %s65 = sadd.s32 %s64, 1
    %p68 = scmp.eq.s32.totalorder %s9, 1
    %p69 = scmp.ne.s32.totalorder %s64, %s66
    %p70 = scmp.eq.s32.totalorder %s9, 0
    %p71 = por %p69, %p70
    %p72 = scmp.ne.s32.totalorder %s64, %s66
    %p73 = scmp.eq.s32.totalorder %s14, 1
    %p74 = por %p72, %p73
    %p75 = scmp.ne.s32.totalorder %s66, %s67
    %p76 = scmp.eq.s32.totalorder %s14, 0
    %p77 = por %p75, %p76
    %p78 = scmp.ne.s32.totalorder %s66, %s67
    %p79 = scmp.eq.s32.totalorder %s15, 1
    %p80 = por %p78, %p79
    %p82 = scmp.ne.s32.totalorder %s67, %s81
    %p83 = scmp.eq.s32.totalorder %s15, 0
    %p84 = por %p82, %p83
    %s85 = ssub.s32 %s9, %s16
    %p86 = scmp.eq.s32.totalorder %s85, 0
    %s88 = sadd.s32 %s87, 1
    %s89 = scalar_select %p86, %s87, %s88
    %p92 = pneg %p86
    %p93 = scmp.eq.s32.totalorder %s9, 1
    %p94 = por %p92, %p93
    %p95 = scmp.ne.s32.totalorder %s87, %s90
    %p96 = scmp.eq.s32.totalorder %s9, 0
    %p97 = por %p95, %p96
    %p98 = scmp.ne.s32.totalorder %s87, %s90
    %p99 = scmp.eq.s32.totalorder %s14, 1
    %p100 = por %p98, %p99
    %p101 = scmp.ne.s32.totalorder %s90, %s91
    %p102 = scmp.eq.s32.totalorder %s14, 0
    %p103 = por %p101, %p102
    %p104 = scmp.ne.s32.totalorder %s90, %s91
    %p105 = scmp.eq.s32.totalorder %s15, 1
    %p106 = por %p104, %p105
    %p108 = scmp.ne.s32.totalorder %s91, %s107
    %p109 = scmp.eq.s32.totalorder %s15, 0
    %p110 = por %p108, %p109
    %p111 = scmp.le.s32.totalorder 1, %s9
    %p112 = scmp.lt.s32.totalorder %s9, 3
    %p113 = pnand %p111, %p112
    %p114 = pneg %p113
    // Predicated region
    $region9: #{ssd_head_forward.1} parent=5 // pred_check
      _
    $region10: #{ssd_head_forward.1} parent=5 // pred_check_branch
      %116 = sbr.rel (%p113) target = $region12
    $region11: #{ssd_head_forward.1} parent=5 // pred_region
      %s117 = ssub.s32 %s9, 1
      // Predicated region
      $region13: #{ssd_head_forward.1} parent=11 // pred_check
        %p118 = pneg %p56
      $region14: #{ssd_head_forward.1} parent=11 // pred_check_branch
        %120 = sbr.rel (%p118) target = $region16
      $region15: #{ssd_head_forward.1} parent=11 // pred_region
        _
      $region16: #{ssd_head_forward.1} parent=11 // pred_fallthru
        _
      // Predicated region
      $region17: #{ssd_head_forward.1} parent=11 // pred_check
        %p121 = pneg %p77
      $region18: #{ssd_head_forward.1} parent=11 // pred_check_branch
        %123 = sbr.rel (%p121) target = $region20
      $region19: #{ssd_head_forward.1} parent=11 // pred_region
        _
      $region20: #{ssd_head_forward.1} parent=11 // pred_fallthru
        _
    $region12: #{ssd_head_forward.1} parent=5 // pred_fallthru
      _
    %p124 = scmp.lt.s32.totalorder %s9, 2
    // Predicated region
    $region21: #{ssd_head_forward.1} parent=5 // pred_check
      %p125 = pneg %p124
    $region22: #{ssd_head_forward.1} parent=5 // pred_check_branch
      %127 = sbr.rel (%p125) target = $region24
    $region23: #{ssd_head_forward.1} parent=5 // pred_region
      // Predicated region
      $region25: #{ssd_head_forward.1} parent=23 // pred_check
        %p128 = pneg %p29
      $region26: #{ssd_head_forward.1} parent=23 // pred_check_branch
        %130 = sbr.rel (%p128) target = $region28
      $region27: #{ssd_head_forward.1} parent=23 // pred_region
        %p131 = scmp.lt.s32.totalorder %s9, 1
        %s132 = scalar_select %p131, %s9, 1
        %s133 = smul.addr %s132, 8
        %s134 = smul.addr %s133, 4
        %s135 = scalar_lea.vmem %s0, %s134
      $region28: #{ssd_head_forward.1} parent=23 // pred_fallthru
        _
    $region24: #{ssd_head_forward.1} parent=5 // pred_fallthru
      _
    %p136 = scmp.le.s32.totalorder 1, %s9
    %p137 = scmp.lt.s32.totalorder %s9, 3
    %p138 = pnand %p136, %p137
    %p139 = pneg %p138
    // Predicated region
    $region29: #{ssd_head_forward.1} parent=5 // pred_check
      _
    $region30: #{ssd_head_forward.1} parent=5 // pred_check_branch
      %141 = sbr.rel (%p138) target = $region32
    $region31: #{ssd_head_forward.1} parent=5 // pred_region
      %s142 = ssub.s32 %s9, 1
      %p143 = scmp.lt.s32.totalorder %s14, 1
      %s144 = scalar_select %p143, %s14, 1
      %s145 = smul.addr %s144, 8
      %s146 = smul.addr %s145, 4
      %s147 = scalar_lea.vmem %s0, %s146
      %p148 = pneg %p35
      %p149 = pneg %p32
      %p150 = pneg %p56
      %p151 = pneg %p53
      %p152 = pneg %p77
      %p153 = pneg %p74
      %p154 = pneg %p103
      %p155 = pneg %p100
      %p156 = scmp.lt.s32.totalorder %s14, 1
      %s157 = scalar_select %p156, %s14, 1
      %s158 = smul.addr %s157, 8
      %s159 = smul.addr %s158, 4
      %s160 = scalar_lea.vmem %s3, %s159
      %p161 = scmp.lt.s32.totalorder %s14, 1
      %s162 = scalar_select %p161, %s14, 1
      %s163 = smul.addr %s162, 8
      %s164 = smul.addr %s163, 4
      %s165 = scalar_lea.vmem %s0, %s164
      %p166 = scmp.lt.s32.totalorder %s14, 1
      %s167 = scalar_select %p166, %s14, 1
      %s168 = smul.addr %s167, 8
      %s169 = smul.addr %s168, 4
      %s170 = scalar_lea.vmem %s3, %s169
      %vm172 = vcmask 125952
      %173 = vst.msk [vmem:[#allocation2] sm:$0xf] %vm172, 0
      %vm174 = vcmask 122880
      %175 = vst.msk [vmem:[#allocation2 + $0x4] sm:$0x1] %vm174, 0
      %s176 = scalar_lea.vmem [#allocation2], 72
      %177 = vst.msk [vmem:[%s176] sm:$0xf] %vm172, 0
      %178 = vst.msk [vmem:[%s176 + $0x4] sm:$0x1] %vm174, 0
      %s179 = scalar_lea.vmem [#allocation2], 8
      %vm180 = vcmask 122880
      %vm181 = vsmask.f32 256
      %vm182 = vmand %vm180, %vm181
      %v183 = vld [vmem:[%s179] sm:$0x1]
      %v184 = vsel %vm182, 0, %v183
      %185 = vst [vmem:[%s179] sm:$0x1] %v184
      %v186 = vld [vmem:[%s179 + $0x8] sm:$0x1]
      %v187 = vsel %vm182, 0, %v186
      %188 = vst [vmem:[%s179 + $0x8] sm:$0x1] %v187
      %v189 = vld [vmem:[%s179 + $0x10] sm:$0x1]
      %v190 = vsel %vm182, 0, %v189
      %191 = vst [vmem:[%s179 + $0x10] sm:$0x1] %v190
      %v192 = vld [vmem:[%s179 + $0x18] sm:$0x1]
      %v193 = vsel %vm182, 0, %v192
      %194 = vst [vmem:[%s179 + $0x18] sm:$0x1] %v193
      %v195 = vld [vmem:[%s179 + $0x20] sm:$0x1]
      %v196 = vsel %vm182, 0, %v195
      %197 = vst [vmem:[%s179 + $0x20] sm:$0x1] %v196
      %v198 = vld [vmem:[%s179 + $0x28] sm:$0x1]
      %v199 = vsel %vm182, 0, %v198
      %200 = vst [vmem:[%s179 + $0x28] sm:$0x1] %v199
      %v201 = vld [vmem:[%s179 + $0x30] sm:$0x1]
      %v202 = vsel %vm182, 0, %v201
      %203 = vst [vmem:[%s179 + $0x30] sm:$0x1] %v202
      %v204 = vld [vmem:[%s179 + $0x38] sm:$0x1]
      %v205 = vsel %vm182, 0, %v204
      %206 = vst [vmem:[%s179 + $0x38] sm:$0x1] %v205
      %vm207 = vsmask.f32 7938
      %vm208 = vmand %vm180, %vm207
      %v209 = vld [vmem:[%s179 + $0x4] sm:$0x1]
      %v210 = vsel %vm208, 0, %v209
      %211 = vst [vmem:[%s179 + $0x4] sm:$0x1] %v210
      %v212 = vld [vmem:[%s179 + $0xc] sm:$0x1]
      %v213 = vsel %vm208, 0, %v212
      %214 = vst [vmem:[%s179 + $0xc] sm:$0x1] %v213
      %v215 = vld [vmem:[%s179 + $0x14] sm:$0x1]
      %v216 = vsel %vm208, 0, %v215
      %217 = vst [vmem:[%s179 + $0x14] sm:$0x1] %v216
      %v218 = vld [vmem:[%s179 + $0x1c] sm:$0x1]
      %v219 = vsel %vm208, 0, %v218
      %220 = vst [vmem:[%s179 + $0x1c] sm:$0x1] %v219
      %v221 = vld [vmem:[%s179 + $0x24] sm:$0x1]
      %v222 = vsel %vm208, 0, %v221
      %223 = vst [vmem:[%s179 + $0x24] sm:$0x1] %v222
      %v224 = vld [vmem:[%s179 + $0x2c] sm:$0x1]
      %v225 = vsel %vm208, 0, %v224
      %226 = vst [vmem:[%s179 + $0x2c] sm:$0x1] %v225
      %v227 = vld [vmem:[%s179 + $0x34] sm:$0x1]
      %v228 = vsel %vm208, 0, %v227
      %229 = vst [vmem:[%s179 + $0x34] sm:$0x1] %v228
      %v230 = vld [vmem:[%s179 + $0x3c] sm:$0x1]
      %v231 = vsel %vm208, 0, %v230
      %232 = vst [vmem:[%s179 + $0x3c] sm:$0x1] %v231
      %v233 = vld [vmem:[%s165] sm:$0xf]
      %v234 = vld [vmem:[%s165 + $0x4] sm:$0xf]
      %v235 = vld [vmem:[%s165 + $0x8] sm:$0xf]
      %v236 = vld [vmem:[%s165 + $0xc] sm:$0xf]
      %v237 = vld [vmem:[%s165 + $0x10] sm:$0xf]
      %v238 = vld [vmem:[%s165 + $0x14] sm:$0xf]
      %v239 = vld [vmem:[%s165 + $0x18] sm:$0xf]
      %v240 = vld [vmem:[%s165 + $0x1c] sm:$0xf]
      %v242 = vshrl.u32 %v233, 16
      %v244 = vrot.slane %v242, 7
      %v245 = vshll.u32 %v233, 16
      %v247 = vor.u32 %v244, %v245
      %v248 = vrot.slane %v244, 4
      %v250 = vshrl.u32 %v234, 16
      %v252 = vrot.slane %v250, 7
      %v253 = vshll.u32 %v234, 16
      %v255 = vor.u32 %v252, %v253
      %v256 = vrot.slane %v252, 4
      %v258 = vshrl.u32 %v235, 16
      %v260 = vrot.slane %v258, 7
      %v261 = vshll.u32 %v235, 16
      %v263 = vor.u32 %v260, %v261
      %v264 = vrot.slane %v260, 4
      %v266 = vshrl.u32 %v236, 16
      %v268 = vrot.slane %v266, 7
      %v269 = vshll.u32 %v236, 16
      %v271 = vor.u32 %v268, %v269
      %v272 = vrot.slane %v268, 4
      %v274 = vshrl.u32 %v237, 16
      %v276 = vrot.slane %v274, 7
      %v277 = vshll.u32 %v237, 16
      %v279 = vor.u32 %v276, %v277
      %v280 = vrot.slane %v276, 4
      %v282 = vshrl.u32 %v238, 16
      %v284 = vrot.slane %v282, 7
      %v285 = vshll.u32 %v238, 16
      %v287 = vor.u32 %v284, %v285
      %v288 = vrot.slane %v284, 4
      %v290 = vshrl.u32 %v239, 16
      %v292 = vrot.slane %v290, 7
      %v293 = vshll.u32 %v239, 16
      %v295 = vor.u32 %v292, %v293
      %v296 = vrot.slane %v292, 4
      %v298 = vshrl.u32 %v240, 16
      %v300 = vrot.slane %v298, 7
      %v301 = vshll.u32 %v240, 16
      %v303 = vor.u32 %v300, %v301
      %v304 = vrot.slane %v300, 4
      %vm321 = vcmask 125952
      %vm322 = vmand %vm321, %vm207
      %v323 = vld [vmem:[%s179] sm:$0xf]
      %v324 = vsel %vm322, %v247, %v323
      %325 = vst [vmem:[%s179] sm:$0xf] %v324
      %v326 = vld [vmem:[%s179 + $0x4] sm:$0x1]
      %v327 = vsel %vm182, %v248, %v326
      %328 = vst [vmem:[%s179 + $0x4] sm:$0x1] %v327
      %v329 = vld [vmem:[%s179 + $0x8] sm:$0xf]
      %v330 = vsel %vm322, %v255, %v329
      %331 = vst [vmem:[%s179 + $0x8] sm:$0xf] %v330
      %v332 = vld [vmem:[%s179 + $0xc] sm:$0x1]
      %v333 = vsel %vm182, %v256, %v332
      %334 = vst [vmem:[%s179 + $0xc] sm:$0x1] %v333
      %v335 = vld [vmem:[%s179 + $0x10] sm:$0xf]
      %v336 = vsel %vm322, %v263, %v335
      %337 = vst [vmem:[%s179 + $0x10] sm:$0xf] %v336
      %v338 = vld [vmem:[%s179 + $0x14] sm:$0x1]
      %v339 = vsel %vm182, %v264, %v338
      %340 = vst [vmem:[%s179 + $0x14] sm:$0x1] %v339
      %v341 = vld [vmem:[%s179 + $0x18] sm:$0xf]
      %v342 = vsel %vm322, %v271, %v341
      %343 = vst [vmem:[%s179 + $0x18] sm:$0xf] %v342
      %v344 = vld [vmem:[%s179 + $0x1c] sm:$0x1]
      %v345 = vsel %vm182, %v272, %v344
      %346 = vst [vmem:[%s179 + $0x1c] sm:$0x1] %v345
      %v347 = vld [vmem:[%s179 + $0x20] sm:$0xf]
      %v348 = vsel %vm322, %v279, %v347
      %349 = vst [vmem:[%s179 + $0x20] sm:$0xf] %v348
      %v350 = vld [vmem:[%s179 + $0x24] sm:$0x1]
      %v351 = vsel %vm182, %v280, %v350
      %352 = vst [vmem:[%s179 + $0x24] sm:$0x1] %v351
      %v353 = vld [vmem:[%s179 + $0x28] sm:$0xf]
      %v354 = vsel %vm322, %v287, %v353
      %355 = vst [vmem:[%s179 + $0x28] sm:$0xf] %v354
      %v356 = vld [vmem:[%s179 + $0x2c] sm:$0x1]
      %v357 = vsel %vm182, %v288, %v356
      %358 = vst [vmem:[%s179 + $0x2c] sm:$0x1] %v357
      %v359 = vld [vmem:[%s179 + $0x30] sm:$0xf]
      %v360 = vsel %vm322, %v295, %v359
      %361 = vst [vmem:[%s179 + $0x30] sm:$0xf] %v360
      %v362 = vld [vmem:[%s179 + $0x34] sm:$0x1]
      %v363 = vsel %vm182, %v296, %v362
      %364 = vst [vmem:[%s179 + $0x34] sm:$0x1] %v363
      %v365 = vld [vmem:[%s179 + $0x38] sm:$0xf]
      %v366 = vsel %vm322, %v303, %v365
      %367 = vst [vmem:[%s179 + $0x38] sm:$0xf] %v366
      %v368 = vld [vmem:[%s179 + $0x3c] sm:$0x1]
      %v369 = vsel %vm182, %v304, %v368
      %370 = vst [vmem:[%s179 + $0x3c] sm:$0x1] %v369
      %v371 = vld [vmem:[%s2] sm:$0x1]
      %v372 = vld [vmem:[#allocation2] sm:$0xf]
      %v373 = vld [vmem:[#allocation2 + $0x8] sm:$0xf]
      %v374 = vld [vmem:[#allocation2 + $0x10] sm:$0xf]
      %v375 = vld [vmem:[#allocation2 + $0x18] sm:$0xf]
      %v376 = vld [vmem:[#allocation2 + $0x20] sm:$0xf]
      %v377 = vld [vmem:[#allocation2 + $0x28] sm:$0xf]
      %v378 = vld [vmem:[#allocation2 + $0x30] sm:$0xf]
      %v379 = vld [vmem:[#allocation2 + $0x38] sm:$0xf]
      %v380 = vld [vmem:[%s1] sm:$0xf]
      %v381 = vld [vmem:[%s1 + $0x4] sm:$0xf]
      %v382 = vld [vmem:[#allocation2 + $0x4] sm:$0x1]
      %v383 = vld [vmem:[#allocation2 + $0xc] sm:$0x1]
      %v384 = vld [vmem:[#allocation2 + $0x14] sm:$0x1]
      %v385 = vld [vmem:[#allocation2 + $0x1c] sm:$0x1]
      %v386 = vld [vmem:[#allocation2 + $0x24] sm:$0x1]
      %v387 = vld [vmem:[#allocation2 + $0x2c] sm:$0x1]
      %v388 = vld [vmem:[#allocation2 + $0x34] sm:$0x1]
      %v389 = vld [vmem:[#allocation2 + $0x3c] sm:$0x1]
      %vm390 = vsmask.f32 3328
      %vm391 = vsmask.f32 7440
      %vm392 = vmor %vm390, %vm391
      %v394 = vshrl.u32 %v372, 16
      %v396 = vrot.slane %v394, 4
      %v397 = vshll.u32 %v372, 16
      %v399 = vrot.slane %v397, 5
      %v400 = vor.u32 %v396, %v399
      %v401 = vrot.slane %v400, 4
      %v403 = vshll.u32 %v382, 16
      %v405 = vrot.slane %v403, 5
      %v406 = vsel %vm392, %v401, %v405
      %v408 = vshrl.u32 %v373, 16
      %v410 = vrot.slane %v408, 4
      %v411 = vshll.u32 %v373, 16
      %v413 = vrot.slane %v411, 5
      %v414 = vor.u32 %v410, %v413
      %v415 = vrot.slane %v414, 4
      %v417 = vshll.u32 %v383, 16
      %v419 = vrot.slane %v417, 5
      %v420 = vsel %vm392, %v415, %v419
      %v422 = vshrl.u32 %v374, 16
      %v424 = vrot.slane %v422, 4
      %v425 = vshll.u32 %v374, 16
      %v427 = vrot.slane %v425, 5
      %v428 = vor.u32 %v424, %v427
      %v429 = vrot.slane %v428, 4
      %v431 = vshll.u32 %v384, 16
      %v433 = vrot.slane %v431, 5
      %v434 = vsel %vm392, %v429, %v433
      %v436 = vshrl.u32 %v375, 16
      %v438 = vrot.slane %v436, 4
      %v439 = vshll.u32 %v375, 16
      %v441 = vrot.slane %v439, 5
      %v442 = vor.u32 %v438, %v441
      %v443 = vrot.slane %v442, 4
      %v445 = vshll.u32 %v385, 16
      %v447 = vrot.slane %v445, 5
      %v448 = vsel %vm392, %v443, %v447
      %v450 = vshrl.u32 %v376, 16
      %v452 = vrot.slane %v450, 4
      %v453 = vshll.u32 %v376, 16
      %v455 = vrot.slane %v453, 5
      %v456 = vor.u32 %v452, %v455
      %v457 = vrot.slane %v456, 4
      %v459 = vshll.u32 %v386, 16
      %v461 = vrot.slane %v459, 5
      %v462 = vsel %vm392, %v457, %v461
      %v464 = vshrl.u32 %v377, 16
      %v466 = vrot.slane %v464, 4
      %v467 = vshll.u32 %v377, 16
      %v469 = vrot.slane %v467, 5
      %v470 = vor.u32 %v466, %v469
      %v471 = vrot.slane %v470, 4
      %v473 = vshll.u32 %v387, 16
      %v475 = vrot.slane %v473, 5
      %v476 = vsel %vm392, %v471, %v475
      %v478 = vshrl.u32 %v378, 16
      %v480 = vrot.slane %v478, 4
      %v481 = vshll.u32 %v378, 16
      %v483 = vrot.slane %v481, 5
      %v484 = vor.u32 %v480, %v483
      %v485 = vrot.slane %v484, 4
      %v487 = vshll.u32 %v388, 16
      %v489 = vrot.slane %v487, 5
      %v490 = vsel %vm392, %v485, %v489
      %v492 = vshrl.u32 %v379, 16
      %v494 = vrot.slane %v492, 4
      %v495 = vshll.u32 %v379, 16
      %v497 = vrot.slane %v495, 5
      %v498 = vor.u32 %v494, %v497
      %v499 = vrot.slane %v498, 4
      %v501 = vshll.u32 %v389, 16
      %v503 = vrot.slane %v501, 5
      %v504 = vsel %vm392, %v499, %v503
      %s505 = scalar_lea.vmem %s1, 8
      %v506 = vld [vmem:[%s505] sm:$0xf]
      %v507 = vld [vmem:[%s505 + $0x4] sm:$0xf]
      %v508 = vunpack.c.l.b16 %v406
      %v509 = vunpack.c.l.b16 %v420
      %v510 = vunpack.c.l.b16 %v434
      %v511 = vunpack.c.l.b16 %v448
      %v512 = vunpack.c.l.b16 %v462
      %v513 = vunpack.c.l.b16 %v476
      %v514 = vunpack.c.l.b16 %v490
      %v515 = vunpack.c.l.b16 %v504
      %v516 = vpack.c.b16 %v509, %v508
      %v517 = vpack.c.b16 %v511, %v510
      %v518 = vpack.c.b16 %v513, %v512
      %v519 = vpack.c.b16 %v515, %v514
      %v522 = vunpack.c.l.b16 %v506
      %v523 = vunpack.c.l.b16 %v507
      %v524 = vpack.c.b16 %v523, %v522
      %vm526 = vcmask 130048
      %v528 = vsel %vm526, %v516, 0
      %v531 = vsel %vm526, %v517, 0
      %v534 = vsel %vm526, %v518, 0
      %v537 = vsel %vm526, %v519, 0
      %539 = vmatpush.bf16.msra.mxu0 0
      %540 = vmatpush.bf16.msra.mxu0 0
      %541 = vmatpush.bf16.msra.mxu0 0
      %542 = vmatpush.bf16.msra.mxu0 0
      %543 = vmatpush.bf16.msra.mxu0 0
      %544 = vmatpush.bf16.msra.mxu0 0
      %545 = vmatpush.bf16.msra.mxu0 0
      %546 = vmatpush.bf16.msra.mxu0 %v524
      %547 = vmatmul.bf16.gmra.mxu0 %v528
      %v548 = vpop.f32.mrf.mxu0
      %v549 = vadd.f32 0.0, %v548
      %v550 = vpop.f32.mrf.mxu0
      %v551 = vadd.f32 0.0, %v550
      %552 = vmatmul.bf16.gmra.mxu0 %v531
      %v553 = vpop.f32.mrf.mxu0
      %v554 = vadd.f32 0.0, %v553
      %v555 = vpop.f32.mrf.mxu0
      %v556 = vadd.f32 0.0, %v555
      %557 = vmatmul.bf16.gmra.mxu0 %v534
      %v558 = vpop.f32.mrf.mxu0
      %v559 = vadd.f32 0.0, %v558
      %v560 = vpop.f32.mrf.mxu0
      %v561 = vadd.f32 0.0, %v560
      %562 = vmatmul.bf16.gmra.mxu0 %v537
      %v563 = vpop.f32.mrf.mxu0
      %v564 = vadd.f32 0.0, %v563
      %v565 = vpop.f32.mrf.mxu0
      %v566 = vadd.f32 0.0, %v565
      %567 = vdwg.mxu0
      %v576 = vunpack.c.l.b16 %v372
      %v577 = vunpack.c.l.b16 %v373
      %v578 = vunpack.c.l.b16 %v374
      %v579 = vunpack.c.l.b16 %v375
      %v580 = vunpack.c.l.b16 %v376
      %v581 = vunpack.c.l.b16 %v377
      %v582 = vunpack.c.l.b16 %v378
      %v583 = vunpack.c.l.b16 %v379
      %v584 = vpack.c.b16 %v577, %v576
      %v585 = vpack.c.b16 %v579, %v578
      %v586 = vpack.c.b16 %v581, %v580
      %v587 = vpack.c.b16 %v583, %v582
      %v590 = vunpack.c.l.b16 %v380
      %v591 = vunpack.c.l.b16 %v381
      %v592 = vpack.c.b16 %v591, %v590
      %v595 = vsel %vm526, %v584, 0
      %v598 = vsel %vm526, %v585, 0
      %v601 = vsel %vm526, %v586, 0
      %v604 = vsel %vm526, %v587, 0
      %606 = vmatpush.bf16.msra.mxu0 0
      %607 = vmatpush.bf16.msra.mxu0 0
      %608 = vmatpush.bf16.msra.mxu0 0
      %609 = vmatpush.bf16.msra.mxu0 0
      %610 = vmatpush.bf16.msra.mxu0 0
      %611 = vmatpush.bf16.msra.mxu0 0
      %612 = vmatpush.bf16.msra.mxu0 0
      %613 = vmatpush.bf16.msra.mxu0 %v592
      %614 = vmatmul.bf16.gmra.mxu0 %v595
      %v615 = vpop.f32.mrf.mxu0
      %v616 = vadd.f32 %v549, %v615
      %v617 = vpop.f32.mrf.mxu0
      %v618 = vadd.f32 %v551, %v617
      %619 = vmatmul.bf16.gmra.mxu0 %v598
      %v620 = vpop.f32.mrf.mxu0
      %v621 = vadd.f32 %v554, %v620
      %v622 = vpop.f32.mrf.mxu0
      %v623 = vadd.f32 %v556, %v622
      %624 = vmatmul.bf16.gmra.mxu0 %v601
      %v625 = vpop.f32.mrf.mxu0
      %v626 = vadd.f32 %v559, %v625
      %v627 = vpop.f32.mrf.mxu0
      %v628 = vadd.f32 %v561, %v627
      %629 = vmatmul.bf16.gmra.mxu0 %v604
      %v630 = vpop.f32.mrf.mxu0
      %v631 = vadd.f32 %v564, %v630
      %v632 = vpop.f32.mrf.mxu0
      %v633 = vadd.f32 %v566, %v632
      %634 = vdwg.mxu0
      %v635 = vld [vmem:[#allocation2] sm:$0xe]
      %v636 = vld [vmem:[#allocation2 + $0x8] sm:$0xe]
      %v637 = vld [vmem:[#allocation2 + $0x10] sm:$0xe]
      %v638 = vld [vmem:[#allocation2 + $0x18] sm:$0xe]
      %v639 = vld [vmem:[#allocation2 + $0x20] sm:$0xe]
      %v640 = vld [vmem:[#allocation2 + $0x28] sm:$0xe]
      %v641 = vld [vmem:[#allocation2 + $0x30] sm:$0xe]
      %v642 = vld [vmem:[#allocation2 + $0x38] sm:$0xe]
      %vm659 = vcmask 1042432
      %vm660 = vcmask 1046532
      %vm661 = vmor %vm659, %vm660
      %v662 = vrot.slane %v635, 5
      %v663 = vrot.slane %v662, 4
      %v664 = vrot.slane %v382, 5
      %v665 = vsel %vm661, %v663, %v664
      %v666 = vrot.slane %v636, 5
      %v667 = vrot.slane %v666, 4
      %v668 = vrot.slane %v383, 5
      %v669 = vsel %vm661, %v667, %v668
      %v670 = vrot.slane %v637, 5
      %v671 = vrot.slane %v670, 4
      %v672 = vrot.slane %v384, 5
      %v673 = vsel %vm661, %v671, %v672
      %v674 = vrot.slane %v638, 5
      %v675 = vrot.slane %v674, 4
      %v676 = vrot.slane %v385, 5
      %v677 = vsel %vm661, %v675, %v676
      %v678 = vrot.slane %v639, 5
      %v679 = vrot.slane %v678, 4
      %v680 = vrot.slane %v386, 5
      %v681 = vsel %vm661, %v679, %v680
      %v682 = vrot.slane %v640, 5
      %v683 = vrot.slane %v682, 4
      %v684 = vrot.slane %v387, 5
      %v685 = vsel %vm661, %v683, %v684
      %v686 = vrot.slane %v641, 5
      %v687 = vrot.slane %v686, 4
      %v688 = vrot.slane %v388, 5
      %v689 = vsel %vm661, %v687, %v688
      %v690 = vrot.slane %v642, 5
      %v691 = vrot.slane %v690, 4
      %v692 = vrot.slane %v389, 5
      %v693 = vsel %vm661, %v691, %v692
      %s694 = scalar_lea.vmem %s1, 16
      %v695 = vld [vmem:[%s694] sm:$0xf]
      %v696 = vld [vmem:[%s694 + $0x4] sm:$0xf]
      %v697 = vunpack.c.l.b16 %v665
      %v698 = vunpack.c.l.b16 %v669
      %v699 = vunpack.c.l.b16 %v673
      %v700 = vunpack.c.l.b16 %v677
      %v701 = vunpack.c.l.b16 %v681
      %v702 = vunpack.c.l.b16 %v685
      %v703 = vunpack.c.l.b16 %v689
      %v704 = vunpack.c.l.b16 %v693
      %v705 = vpack.c.b16 %v698, %v697
      %v706 = vpack.c.b16 %v700, %v699
      %v707 = vpack.c.b16 %v702, %v701
      %v708 = vpack.c.b16 %v704, %v703
      %v711 = vunpack.c.l.b16 %v695
      %v712 = vunpack.c.l.b16 %v696
      %v713 = vpack.c.b16 %v712, %v711
      %v716 = vsel %vm526, %v705, 0
      %v719 = vsel %vm526, %v706, 0
      %v722 = vsel %vm526, %v707, 0
      %v725 = vsel %vm526, %v708, 0
      %727 = vmatpush.bf16.msra.mxu0 0
      %728 = vmatpush.bf16.msra.mxu0 0
      %729 = vmatpush.bf16.msra.mxu0 0
      %730 = vmatpush.bf16.msra.mxu0 0
      %731 = vmatpush.bf16.msra.mxu0 0
      %732 = vmatpush.bf16.msra.mxu0 0
      %733 = vmatpush.bf16.msra.mxu0 0
      %734 = vmatpush.bf16.msra.mxu0 %v713
      %735 = vmatmul.bf16.gmra.mxu0 %v716
      %v736 = vpop.f32.mrf.mxu0
      %v737 = vadd.f32 0.0, %v736
      %v738 = vpop.f32.mrf.mxu0
      %v739 = vadd.f32 0.0, %v738
      %740 = vmatmul.bf16.gmra.mxu0 %v719
      %v741 = vpop.f32.mrf.mxu0
      %v742 = vadd.f32 0.0, %v741
      %v743 = vpop.f32.mrf.mxu0
      %v744 = vadd.f32 0.0, %v743
      %745 = vmatmul.bf16.gmra.mxu0 %v722
      %v746 = vpop.f32.mrf.mxu0
      %v747 = vadd.f32 0.0, %v746
      %v748 = vpop.f32.mrf.mxu0
      %v749 = vadd.f32 0.0, %v748
      %750 = vmatmul.bf16.gmra.mxu0 %v725
      %v751 = vpop.f32.mrf.mxu0
      %v752 = vadd.f32 0.0, %v751
      %v753 = vpop.f32.mrf.mxu0
      %v754 = vadd.f32 0.0, %v753
      %755 = vdwg.mxu0
      %v756 = vadd.f32 %v616, %v737
      %v757 = vadd.f32 %v618, %v739
      %v758 = vadd.f32 %v621, %v742
      %v759 = vadd.f32 %v623, %v744
      %v760 = vadd.f32 %v626, %v747
      %v761 = vadd.f32 %v628, %v749
      %v762 = vadd.f32 %v631, %v752
      %v763 = vadd.f32 %v633, %v754
      %v764 = vld [vmem:[%s179] sm:$0xf]
      %v765 = vld [vmem:[%s179 + $0x8] sm:$0xf]
      %v766 = vld [vmem:[%s179 + $0x10] sm:$0xf]
      %v767 = vld [vmem:[%s179 + $0x18] sm:$0xf]
      %v768 = vld [vmem:[%s179 + $0x20] sm:$0xf]
      %v769 = vld [vmem:[%s179 + $0x28] sm:$0xf]
      %v770 = vld [vmem:[%s179 + $0x30] sm:$0xf]
      %v771 = vld [vmem:[%s179 + $0x38] sm:$0xf]
      %s772 = scalar_lea.vmem %s1, 24
      %v773 = vld [vmem:[%s772] sm:$0xf]
      %v774 = vld [vmem:[%s772 + $0x4] sm:$0xf]
      %v783 = vunpack.c.l.b16 %v764
      %v784 = vunpack.c.l.b16 %v765
      %v785 = vunpack.c.l.b16 %v766
      %v786 = vunpack.c.l.b16 %v767
      %v787 = vunpack.c.l.b16 %v768
      %v788 = vunpack.c.l.b16 %v769
      %v789 = vunpack.c.l.b16 %v770
      %v790 = vunpack.c.l.b16 %v771
      %v791 = vpack.c.b16 %v784, %v783
      %v792 = vpack.c.b16 %v786, %v785
      %v793 = vpack.c.b16 %v788, %v787
      %v794 = vpack.c.b16 %v790, %v789
      %v797 = vunpack.c.l.b16 %v773
      %v798 = vunpack.c.l.b16 %v774
      %v799 = vpack.c.b16 %v798, %v797
      %v802 = vsel %vm526, %v791, 0
      %v805 = vsel %vm526, %v792, 0
      %v808 = vsel %vm526, %v793, 0
      %v811 = vsel %vm526, %v794, 0
      %813 = vmatpush.bf16.msra.mxu0 0
      %814 = vmatpush.bf16.msra.mxu0 0
      %815 = vmatpush.bf16.msra.mxu0 0
      %816 = vmatpush.bf16.msra.mxu0 0
      %817 = vmatpush.bf16.msra.mxu0 0
      %818 = vmatpush.bf16.msra.mxu0 0
      %819 = vmatpush.bf16.msra.mxu0 0
      %820 = vmatpush.bf16.msra.mxu0 %v799
      %821 = vmatmul.bf16.gmra.mxu0 %v802
      %v822 = vpop.f32.mrf.mxu0
      %v823 = vadd.f32 0.0, %v822
      %v824 = vpop.f32.mrf.mxu0
      %v825 = vadd.f32 0.0, %v824
      %826 = vmatmul.bf16.gmra.mxu0 %v805
      %v827 = vpop.f32.mrf.mxu0
      %v828 = vadd.f32 0.0, %v827
      %v829 = vpop.f32.mrf.mxu0
      %v830 = vadd.f32 0.0, %v829
      %831 = vmatmul.bf16.gmra.mxu0 %v808
      %v832 = vpop.f32.mrf.mxu0
      %v833 = vadd.f32 0.0, %v832
      %v834 = vpop.f32.mrf.mxu0
      %v835 = vadd.f32 0.0, %v834
      %836 = vmatmul.bf16.gmra.mxu0 %v811
      %v837 = vpop.f32.mrf.mxu0
      %v838 = vadd.f32 0.0, %v837
      %v839 = vpop.f32.mrf.mxu0
      %v840 = vadd.f32 0.0, %v839
      %841 = vdwg.mxu0
      %v842 = vadd.f32 %v756, %v823
      %v843 = vadd.f32 %v757, %v825
      %v844 = vadd.f32 %v758, %v828
      %v845 = vadd.f32 %v759, %v830
      %v846 = vadd.f32 %v760, %v833
      %v847 = vadd.f32 %v761, %v835
      %v848 = vadd.f32 %v762, %v838
      %v849 = vadd.f32 %v763, %v840
      %v850 = vld [vmem:[%s179] sm:$0xf]
      %v851 = vld [vmem:[%s179 + $0x4] sm:$0x1]
      %v852 = vld [vmem:[%s179 + $0x8] sm:$0xf]
      %v853 = vld [vmem:[%s179 + $0xc] sm:$0x1]
      %v854 = vld [vmem:[%s179 + $0x10] sm:$0xf]
      %v855 = vld [vmem:[%s179 + $0x14] sm:$0x1]
      %v856 = vld [vmem:[%s179 + $0x18] sm:$0xf]
      %v857 = vld [vmem:[%s179 + $0x1c] sm:$0x1]
      %v858 = vld [vmem:[%s179 + $0x20] sm:$0xf]
      %v859 = vld [vmem:[%s179 + $0x24] sm:$0x1]
      %v860 = vld [vmem:[%s179 + $0x28] sm:$0xf]
      %v861 = vld [vmem:[%s179 + $0x2c] sm:$0x1]
      %v862 = vld [vmem:[%s179 + $0x30] sm:$0xf]
      %v863 = vld [vmem:[%s179 + $0x34] sm:$0x1]
      %v864 = vld [vmem:[%s179 + $0x38] sm:$0xf]
      %v865 = vld [vmem:[%s179 + $0x3c] sm:$0x1]
      %v867 = vshrl.u32 %v850, 16
      %v869 = vrot.slane %v867, 4
      %v870 = vshll.u32 %v850, 16
      %v872 = vrot.slane %v870, 5
      %v873 = vor.u32 %v869, %v872
      %v874 = vrot.slane %v873, 4
      %v876 = vshll.u32 %v851, 16
      %v878 = vrot.slane %v876, 5
      %v879 = vsel %vm392, %v874, %v878
      %v881 = vshrl.u32 %v852, 16
      %v883 = vrot.slane %v881, 4
      %v884 = vshll.u32 %v852, 16
      %v886 = vrot.slane %v884, 5
      %v887 = vor.u32 %v883, %v886
      %v888 = vrot.slane %v887, 4
      %v890 = vshll.u32 %v853, 16
      %v892 = vrot.slane %v890, 5
      %v893 = vsel %vm392, %v888, %v892
      %v895 = vshrl.u32 %v854, 16
      %v897 = vrot.slane %v895, 4
      %v898 = vshll.u32 %v854, 16
      %v900 = vrot.slane %v898, 5
      %v901 = vor.u32 %v897, %v900
      %v902 = vrot.slane %v901, 4
      %v904 = vshll.u32 %v855, 16
      %v906 = vrot.slane %v904, 5
      %v907 = vsel %vm392, %v902, %v906
      %v909 = vshrl.u32 %v856, 16
      %v911 = vrot.slane %v909, 4
      %v912 = vshll.u32 %v856, 16
      %v914 = vrot.slane %v912, 5
      %v915 = vor.u32 %v911, %v914
      %v916 = vrot.slane %v915, 4
      %v918 = vshll.u32 %v857, 16
      %v920 = vrot.slane %v918, 5
      %v921 = vsel %vm392, %v916, %v920
      %v923 = vshrl.u32 %v858, 16
      %v925 = vrot.slane %v923, 4
      %v926 = vshll.u32 %v858, 16
      %v928 = vrot.slane %v926, 5
      %v929 = vor.u32 %v925, %v928
      %v930 = vrot.slane %v929, 4
      %v932 = vshll.u32 %v859, 16
      %v934 = vrot.slane %v932, 5
      %v935 = vsel %vm392, %v930, %v934
      %v937 = vshrl.u32 %v860, 16
      %v939 = vrot.slane %v937, 4
      %v940 = vshll.u32 %v860, 16
      %v942 = vrot.slane %v940, 5
      %v943 = vor.u32 %v939, %v942
      %v944 = vrot.slane %v943, 4
      %v946 = vshll.u32 %v861, 16
      %v948 = vrot.slane %v946, 5
      %v949 = vsel %vm392, %v944, %v948
      %v951 = vshrl.u32 %v862, 16
      %v953 = vrot.slane %v951, 4
      %v954 = vshll.u32 %v862, 16
      %v956 = vrot.slane %v954, 5
      %v957 = vor.u32 %v953, %v956
      %v958 = vrot.slane %v957, 4
      %v960 = vshll.u32 %v863, 16
      %v962 = vrot.slane %v960, 5
      %v963 = vsel %vm392, %v958, %v962
      %v965 = vshrl.u32 %v864, 16
      %v967 = vrot.slane %v965, 4
      %v968 = vshll.u32 %v864, 16
      %v970 = vrot.slane %v968, 5
      %v971 = vor.u32 %v967, %v970
      %v972 = vrot.slane %v971, 4
      %v974 = vshll.u32 %v865, 16
      %v976 = vrot.slane %v974, 5
      %v977 = vsel %vm392, %v972, %v976
      %s978 = scalar_lea.vmem %s1, 32
      %v979 = vld [vmem:[%s978] sm:$0xf]
      %v980 = vld [vmem:[%s978 + $0x4] sm:$0xf]
      %v981 = vunpack.c.l.b16 %v879
      %v982 = vunpack.c.l.b16 %v893
      %v983 = vunpack.c.l.b16 %v907
      %v984 = vunpack.c.l.b16 %v921
      %v985 = vunpack.c.l.b16 %v935
      %v986 = vunpack.c.l.b16 %v949
      %v987 = vunpack.c.l.b16 %v963
      %v988 = vunpack.c.l.b16 %v977
      %v989 = vpack.c.b16 %v982, %v981
      %v990 = vpack.c.b16 %v984, %v983
      %v991 = vpack.c.b16 %v986, %v985
      %v992 = vpack.c.b16 %v988, %v987
      %v995 = vunpack.c.l.b16 %v979
      %v996 = vunpack.c.l.b16 %v980
      %v997 = vpack.c.b16 %v996, %v995
      %v1000 = vsel %vm526, %v989, 0
      %v1003 = vsel %vm526, %v990, 0
      %v1006 = vsel %vm526, %v991, 0
      %v1009 = vsel %vm526, %v992, 0
      %1011 = vmatpush.bf16.msra.mxu0 0
      %1012 = vmatpush.bf16.msra.mxu0 0
      %1013 = vmatpush.bf16.msra.mxu0 0
      %1014 = vmatpush.bf16.msra.mxu0 0
      %1015 = vmatpush.bf16.msra.mxu0 0
      %1016 = vmatpush.bf16.msra.mxu0 0
      %1017 = vmatpush.bf16.msra.mxu0 0
      %1018 = vmatpush.bf16.msra.mxu0 %v997
      %1019 = vmatmul.bf16.gmra.mxu0 %v1000
      %v1020 = vpop.f32.mrf.mxu0
      %v1021 = vadd.f32 0.0, %v1020
      %v1022 = vpop.f32.mrf.mxu0
      %v1023 = vadd.f32 0.0, %v1022
      %1024 = vmatmul.bf16.gmra.mxu0 %v1003
      %v1025 = vpop.f32.mrf.mxu0
      %v1026 = vadd.f32 0.0, %v1025
      %v1027 = vpop.f32.mrf.mxu0
      %v1028 = vadd.f32 0.0, %v1027
      %1029 = vmatmul.bf16.gmra.mxu0 %v1006
      %v1030 = vpop.f32.mrf.mxu0
      %v1031 = vadd.f32 0.0, %v1030
      %v1032 = vpop.f32.mrf.mxu0
      %v1033 = vadd.f32 0.0, %v1032
      %1034 = vmatmul.bf16.gmra.mxu0 %v1009
      %v1035 = vpop.f32.mrf.mxu0
      %v1036 = vadd.f32 0.0, %v1035
      %v1037 = vpop.f32.mrf.mxu0
      %v1038 = vadd.f32 0.0, %v1037
      %1039 = vdwg.mxu0
      %v1040 = vadd.f32 %v842, %v1021
      %v1041 = vadd.f32 %v843, %v1023
      %v1042 = vadd.f32 %v844, %v1026
      %v1043 = vadd.f32 %v845, %v1028
      %v1044 = vadd.f32 %v846, %v1031
      %v1045 = vadd.f32 %v847, %v1033
      %v1046 = vadd.f32 %v848, %v1036
      %v1047 = vadd.f32 %v849, %v1038
      %v1048 = vld [vmem:[%s179] sm:$0xe]
      %v1049 = vld [vmem:[%s179 + $0x8] sm:$0xe]
      %v1050 = vld [vmem:[%s179 + $0x10] sm:$0xe]
      %v1051 = vld [vmem:[%s179 + $0x18] sm:$0xe]
      %v1052 = vld [vmem:[%s179 + $0x20] sm:$0xe]
      %v1053 = vld [vmem:[%s179 + $0x28] sm:$0xe]
      %v1054 = vld [vmem:[%s179 + $0x30] sm:$0xe]
      %v1055 = vld [vmem:[%s179 + $0x38] sm:$0xe]
      %v1072 = vrot.slane %v1048, 5
      %v1073 = vrot.slane %v1072, 4
      %v1074 = vrot.slane %v851, 5
      %v1075 = vsel %vm661, %v1073, %v1074
      %v1076 = vrot.slane %v1049, 5
      %v1077 = vrot.slane %v1076, 4
      %v1078 = vrot.slane %v853, 5
      %v1079 = vsel %vm661, %v1077, %v1078
      %v1080 = vrot.slane %v1050, 5
      %v1081 = vrot.slane %v1080, 4
      %v1082 = vrot.slane %v855, 5
      %v1083 = vsel %vm661, %v1081, %v1082
      %v1084 = vrot.slane %v1051, 5
      %v1085 = vrot.slane %v1084, 4
      %v1086 = vrot.slane %v857, 5
      %v1087 = vsel %vm661, %v1085, %v1086
      %v1088 = vrot.slane %v1052, 5
      %v1089 = vrot.slane %v1088, 4
      %v1090 = vrot.slane %v859, 5
      %v1091 = vsel %vm661, %v1089, %v1090
      %v1092 = vrot.slane %v1053, 5
      %v1093 = vrot.slane %v1092, 4
      %v1094 = vrot.slane %v861, 5
      %v1095 = vsel %vm661, %v1093, %v1094
      %v1096 = vrot.slane %v1054, 5
      %v1097 = vrot.slane %v1096, 4
      %v1098 = vrot.slane %v863, 5
      %v1099 = vsel %vm661, %v1097, %v1098
      %v1100 = vrot.slane %v1055, 5
      %v1101 = vrot.slane %v1100, 4
      %v1102 = vrot.slane %v865, 5
      %v1103 = vsel %vm661, %v1101, %v1102
      %s1104 = scalar_lea.vmem %s1, 40
      %v1105 = vld [vmem:[%s1104] sm:$0xf]
      %v1106 = vld [vmem:[%s1104 + $0x4] sm:$0xf]
      %v1107 = vunpack.c.l.b16 %v1075
      %v1108 = vunpack.c.l.b16 %v1079
      %v1109 = vunpack.c.l.b16 %v1083
      %v1110 = vunpack.c.l.b16 %v1087
      %v1111 = vunpack.c.l.b16 %v1091
      %v1112 = vunpack.c.l.b16 %v1095
      %v1113 = vunpack.c.l.b16 %v1099
      %v1114 = vunpack.c.l.b16 %v1103
      %v1115 = vpack.c.b16 %v1108, %v1107
      %v1116 = vpack.c.b16 %v1110, %v1109
      %v1117 = vpack.c.b16 %v1112, %v1111
      %v1118 = vpack.c.b16 %v1114, %v1113
      %v1121 = vunpack.c.l.b16 %v1105
      %v1122 = vunpack.c.l.b16 %v1106
      %v1123 = vpack.c.b16 %v1122, %v1121
      %v1126 = vsel %vm526, %v1115, 0
      %v1129 = vsel %vm526, %v1116, 0
      %v1132 = vsel %vm526, %v1117, 0
      %v1135 = vsel %vm526, %v1118, 0
      %1137 = vmatpush.bf16.msra.mxu0 0
      %1138 = vmatpush.bf16.msra.mxu0 0
      %1139 = vmatpush.bf16.msra.mxu0 0
      %1140 = vmatpush.bf16.msra.mxu0 0
      %1141 = vmatpush.bf16.msra.mxu0 0
      %1142 = vmatpush.bf16.msra.mxu0 0
      %1143 = vmatpush.bf16.msra.mxu0 0
      %1144 = vmatpush.bf16.msra.mxu0 %v1123
      %1145 = vmatmul.bf16.gmra.mxu0 %v1126
      %v1146 = vpop.f32.mrf.mxu0
      %v1147 = vadd.f32 0.0, %v1146
      %v1148 = vpop.f32.mrf.mxu0
      %v1149 = vadd.f32 0.0, %v1148
      %1150 = vmatmul.bf16.gmra.mxu0 %v1129
      %v1151 = vpop.f32.mrf.mxu0
      %v1152 = vadd.f32 0.0, %v1151
      %v1153 = vpop.f32.mrf.mxu0
      %v1154 = vadd.f32 0.0, %v1153
      %1155 = vmatmul.bf16.gmra.mxu0 %v1132
      %v1156 = vpop.f32.mrf.mxu0
      %v1157 = vadd.f32 0.0, %v1156
      %v1158 = vpop.f32.mrf.mxu0
      %v1159 = vadd.f32 0.0, %v1158
      %1160 = vmatmul.bf16.gmra.mxu0 %v1135
      %v1161 = vpop.f32.mrf.mxu0
      %v1162 = vadd.f32 0.0, %v1161
      %v1163 = vpop.f32.mrf.mxu0
      %v1164 = vadd.f32 0.0, %v1163
      %1165 = vdwg.mxu0
      %v1166 = vadd.f32 %v1040, %v1147
      %v1167 = vadd.f32 %v1041, %v1149
      %v1168 = vadd.f32 %v1042, %v1152
      %v1169 = vadd.f32 %v1043, %v1154
      %v1170 = vadd.f32 %v1044, %v1157
      %v1171 = vadd.f32 %v1045, %v1159
      %v1172 = vadd.f32 %v1046, %v1162
      %v1173 = vadd.f32 %v1047, %v1164
      %s1174 = scalar_lea.vmem [#allocation2], 16
      %v1175 = vld [vmem:[%s1174] sm:$0xf]
      %v1176 = vld [vmem:[%s1174 + $0x8] sm:$0xf]
      %v1177 = vld [vmem:[%s1174 + $0x10] sm:$0xf]
      %v1178 = vld [vmem:[%s1174 + $0x18] sm:$0xf]
      %v1179 = vld [vmem:[%s1174 + $0x20] sm:$0xf]
      %v1180 = vld [vmem:[%s1174 + $0x28] sm:$0xf]
      %v1181 = vld [vmem:[%s1174 + $0x30] sm:$0xf]
      %v1182 = vld [vmem:[%s1174 + $0x38] sm:$0xf]
      %s1183 = scalar_lea.vmem %s1, 48
      %v1184 = vld [vmem:[%s1183] sm:$0xf]
      %v1185 = vld [vmem:[%s1183 + $0x4] sm:$0xf]
      %v1194 = vunpack.c.l.b16 %v1175
      %v1195 = vunpack.c.l.b16 %v1176
      %v1196 = vunpack.c.l.b16 %v1177
      %v1197 = vunpack.c.l.b16 %v1178
      %v1198 = vunpack.c.l.b16 %v1179
      %v1199 = vunpack.c.l.b16 %v1180
      %v1200 = vunpack.c.l.b16 %v1181
      %v1201 = vunpack.c.l.b16 %v1182
      %v1202 = vpack.c.b16 %v1195, %v1194
      %v1203 = vpack.c.b16 %v1197, %v1196
      %v1204 = vpack.c.b16 %v1199, %v1198
      %v1205 = vpack.c.b16 %v1201, %v1200
      %v1208 = vunpack.c.l.b16 %v1184
      %v1209 = vunpack.c.l.b16 %v1185
      %v1210 = vpack.c.b16 %v1209, %v1208
      %v1213 = vsel %vm526, %v1202, 0
      %v1216 = vsel %vm526, %v1203, 0
      %v1219 = vsel %vm526, %v1204, 0
      %v1222 = vsel %vm526, %v1205, 0
      %1224 = vmatpush.bf16.msra.mxu0 0
      %1225 = vmatpush.bf16.msra.mxu0 0
      %1226 = vmatpush.bf16.msra.mxu0 0
      %1227 = vmatpush.bf16.msra.mxu0 0
      %1228 = vmatpush.bf16.msra.mxu0 0
      %1229 = vmatpush.bf16.msra.mxu0 0
      %1230 = vmatpush.bf16.msra.mxu0 0
      %1231 = vmatpush.bf16.msra.mxu0 %v1210
      %1232 = vmatmul.bf16.gmra.mxu0 %v1213
      %v1233 = vpop.f32.mrf.mxu0
      %v1234 = vadd.f32 0.0, %v1233
      %v1235 = vpop.f32.mrf.mxu0
      %v1236 = vadd.f32 0.0, %v1235
      %1237 = vmatmul.bf16.gmra.mxu0 %v1216
      %v1238 = vpop.f32.mrf.mxu0
      %v1239 = vadd.f32 0.0, %v1238
      %v1240 = vpop.f32.mrf.mxu0
      %v1241 = vadd.f32 0.0, %v1240
      %1242 = vmatmul.bf16.gmra.mxu0 %v1219
      %v1243 = vpop.f32.mrf.mxu0
      %v1244 = vadd.f32 0.0, %v1243
      %v1245 = vpop.f32.mrf.mxu0
      %v1246 = vadd.f32 0.0, %v1245
      %1247 = vmatmul.bf16.gmra.mxu0 %v1222
      %v1248 = vpop.f32.mrf.mxu0
      %v1249 = vadd.f32 0.0, %v1248
      %v1250 = vpop.f32.mrf.mxu0
      %v1251 = vadd.f32 0.0, %v1250
      %1252 = vdwg.mxu0
      %v1253 = vadd.f32 %v1166, %v1234
      %v1254 = vadd.f32 %v1167, %v1236
      %v1255 = vadd.f32 %v1168, %v1239
      %v1256 = vadd.f32 %v1169, %v1241
      %v1257 = vadd.f32 %v1170, %v1244
      %v1258 = vadd.f32 %v1171, %v1246
      %v1259 = vadd.f32 %v1172, %v1249
      %v1260 = vadd.f32 %v1173, %v1251
      %v1261 = vld [vmem:[%s1174] sm:$0xf]
      %v1262 = vld [vmem:[%s1174 + $0x4] sm:$0x1]
      %v1263 = vld [vmem:[%s1174 + $0x8] sm:$0xf]
      %v1264 = vld [vmem:[%s1174 + $0xc] sm:$0x1]
      %v1265 = vld [vmem:[%s1174 + $0x10] sm:$0xf]
      %v1266 = vld [vmem:[%s1174 + $0x14] sm:$0x1]
      %v1267 = vld [vmem:[%s1174 + $0x18] sm:$0xf]
      %v1268 = vld [vmem:[%s1174 + $0x1c] sm:$0x1]
      %v1269 = vld [vmem:[%s1174 + $0x20] sm:$0xf]
      %v1270 = vld [vmem:[%s1174 + $0x24] sm:$0x1]
      %v1271 = vld [vmem:[%s1174 + $0x28] sm:$0xf]
      %v1272 = vld [vmem:[%s1174 + $0x2c] sm:$0x1]
      %v1273 = vld [vmem:[%s1174 + $0x30] sm:$0xf]
      %v1274 = vld [vmem:[%s1174 + $0x34] sm:$0x1]
      %v1275 = vld [vmem:[%s1174 + $0x38] sm:$0xf]
      %v1276 = vld [vmem:[%s1174 + $0x3c] sm:$0x1]
      %v1278 = vshrl.u32 %v1261, 16
      %v1280 = vrot.slane %v1278, 4
      %v1281 = vshll.u32 %v1261, 16
      %v1283 = vrot.slane %v1281, 5
      %v1284 = vor.u32 %v1280, %v1283
      %v1285 = vrot.slane %v1284, 4
      %v1287 = vshll.u32 %v1262, 16
      %v1289 = vrot.slane %v1287, 5
      %v1290 = vsel %vm392, %v1285, %v1289
      %v1292 = vshrl.u32 %v1263, 16
      %v1294 = vrot.slane %v1292, 4
      %v1295 = vshll.u32 %v1263, 16
      %v1297 = vrot.slane %v1295, 5
      %v1298 = vor.u32 %v1294, %v1297
      %v1299 = vrot.slane %v1298, 4
      %v1301 = vshll.u32 %v1264, 16
      %v1303 = vrot.slane %v1301, 5
      %v1304 = vsel %vm392, %v1299, %v1303
      %v1306 = vshrl.u32 %v1265, 16
      %v1308 = vrot.slane %v1306, 4
      %v1309 = vshll.u32 %v1265, 16
      %v1311 = vrot.slane %v1309, 5
      %v1312 = vor.u32 %v1308, %v1311
      %v1313 = vrot.slane %v1312, 4
      %v1315 = vshll.u32 %v1266, 16
      %v1317 = vrot.slane %v1315, 5
      %v1318 = vsel %vm392, %v1313, %v1317
      %v1320 = vshrl.u32 %v1267, 16
      %v1322 = vrot.slane %v1320, 4
      %v1323 = vshll.u32 %v1267, 16
      %v1325 = vrot.slane %v1323, 5
      %v1326 = vor.u32 %v1322, %v1325
      %v1327 = vrot.slane %v1326, 4
      %v1329 = vshll.u32 %v1268, 16
      %v1331 = vrot.slane %v1329, 5
      %v1332 = vsel %vm392, %v1327, %v1331
      %v1334 = vshrl.u32 %v1269, 16
      %v1336 = vrot.slane %v1334, 4
      %v1337 = vshll.u32 %v1269, 16
      %v1339 = vrot.slane %v1337, 5
      %v1340 = vor.u32 %v1336, %v1339
      %v1341 = vrot.slane %v1340, 4
      %v1343 = vshll.u32 %v1270, 16
      %v1345 = vrot.slane %v1343, 5
      %v1346 = vsel %vm392, %v1341, %v1345
      %v1348 = vshrl.u32 %v1271, 16
      %v1350 = vrot.slane %v1348, 4
      %v1351 = vshll.u32 %v1271, 16
      %v1353 = vrot.slane %v1351, 5
      %v1354 = vor.u32 %v1350, %v1353
      %v1355 = vrot.slane %v1354, 4
      %v1357 = vshll.u32 %v1272, 16
      %v1359 = vrot.slane %v1357, 5
      %v1360 = vsel %vm392, %v1355, %v1359
      %v1362 = vshrl.u32 %v1273, 16
      %v1364 = vrot.slane %v1362, 4
      %v1365 = vshll.u32 %v1273, 16
      %v1367 = vrot.slane %v1365, 5
      %v1368 = vor.u32 %v1364, %v1367
      %v1369 = vrot.slane %v1368, 4
      %v1371 = vshll.u32 %v1274, 16
      %v1373 = vrot.slane %v1371, 5
      %v1374 = vsel %vm392, %v1369, %v1373
      %v1376 = vshrl.u32 %v1275, 16
      %v1378 = vrot.slane %v1376, 4
      %v1379 = vshll.u32 %v1275, 16
      %v1381 = vrot.slane %v1379, 5
      %v1382 = vor.u32 %v1378, %v1381
      %v1383 = vrot.slane %v1382, 4
      %v1385 = vshll.u32 %v1276, 16
      %v1387 = vrot.slane %v1385, 5
      %v1388 = vsel %vm392, %v1383, %v1387
      %s1389 = scalar_lea.vmem %s1, 56
      %v1390 = vld [vmem:[%s1389] sm:$0xf]
      %v1391 = vld [vmem:[%s1389 + $0x4] sm:$0xf]
      %v1392 = vunpack.c.l.b16 %v1290
      %v1393 = vunpack.c.l.b16 %v1304
      %v1394 = vunpack.c.l.b16 %v1318
      %v1395 = vunpack.c.l.b16 %v1332
      %v1396 = vunpack.c.l.b16 %v1346
      %v1397 = vunpack.c.l.b16 %v1360
      %v1398 = vunpack.c.l.b16 %v1374
      %v1399 = vunpack.c.l.b16 %v1388
      %v1400 = vpack.c.b16 %v1393, %v1392
      %v1401 = vpack.c.b16 %v1395, %v1394
      %v1402 = vpack.c.b16 %v1397, %v1396
      %v1403 = vpack.c.b16 %v1399, %v1398
      %v1406 = vunpack.c.l.b16 %v1390
      %v1407 = vunpack.c.l.b16 %v1391
      %v1408 = vpack.c.b16 %v1407, %v1406
      %v1411 = vsel %vm526, %v1400, 0
      %v1414 = vsel %vm526, %v1401, 0
      %v1417 = vsel %vm526, %v1402, 0
      %v1420 = vsel %vm526, %v1403, 0
      %1422 = vmatpush.bf16.msra.mxu0 0
      %1423 = vmatpush.bf16.msra.mxu0 0
      %1424 = vmatpush.bf16.msra.mxu0 0
      %1425 = vmatpush.bf16.msra.mxu0 0
      %1426 = vmatpush.bf16.msra.mxu0 0
      %1427 = vmatpush.bf16.msra.mxu0 0
      %1428 = vmatpush.bf16.msra.mxu0 0
      %1429 = vmatpush.bf16.msra.mxu0 %v1408
      %1430 = vmatmul.bf16.gmra.mxu0 %v1411
      %v1431 = vpop.f32.mrf.mxu0
      %v1432 = vadd.f32 0.0, %v1431
      %v1433 = vpop.f32.mrf.mxu0
      %v1434 = vadd.f32 0.0, %v1433
      %1435 = vmatmul.bf16.gmra.mxu0 %v1414
      %v1436 = vpop.f32.mrf.mxu0
      %v1437 = vadd.f32 0.0, %v1436
      %v1438 = vpop.f32.mrf.mxu0
      %v1439 = vadd.f32 0.0, %v1438
      %1440 = vmatmul.bf16.gmra.mxu0 %v1417
      %v1441 = vpop.f32.mrf.mxu0
      %v1442 = vadd.f32 0.0, %v1441
      %v1443 = vpop.f32.mrf.mxu0
      %v1444 = vadd.f32 0.0, %v1443
      %1445 = vmatmul.bf16.gmra.mxu0 %v1420
      %v1446 = vpop.f32.mrf.mxu0
      %v1447 = vadd.f32 0.0, %v1446
      %v1448 = vpop.f32.mrf.mxu0
      %v1449 = vadd.f32 0.0, %v1448
      %1450 = vdwg.mxu0
      %v1451 = vadd.f32 %v1253, %v1432
      %v1452 = vadd.f32 %v1254, %v1434
      %v1453 = vadd.f32 %v1255, %v1437
      %v1454 = vadd.f32 %v1256, %v1439
      %v1455 = vadd.f32 %v1257, %v1442
      %v1456 = vadd.f32 %v1258, %v1444
      %v1457 = vadd.f32 %v1259, %v1447
      %v1458 = vadd.f32 %v1260, %v1449
      %v1459 = vld [vmem:[%s1174] sm:$0xe]
      %v1460 = vld [vmem:[%s1174 + $0x8] sm:$0xe]
      %v1461 = vld [vmem:[%s1174 + $0x10] sm:$0xe]
      %v1462 = vld [vmem:[%s1174 + $0x18] sm:$0xe]
      %v1463 = vld [vmem:[%s1174 + $0x20] sm:$0xe]
      %v1464 = vld [vmem:[%s1174 + $0x28] sm:$0xe]
      %v1465 = vld [vmem:[%s1174 + $0x30] sm:$0xe]
      %v1466 = vld [vmem:[%s1174 + $0x38] sm:$0xe]
      %v1483 = vrot.slane %v1459, 5
      %v1484 = vrot.slane %v1483, 4
      %v1485 = vrot.slane %v1262, 5
      %v1486 = vsel %vm661, %v1484, %v1485
      %v1487 = vrot.slane %v1460, 5
      %v1488 = vrot.slane %v1487, 4
      %v1489 = vrot.slane %v1264, 5
      %v1490 = vsel %vm661, %v1488, %v1489
      %v1491 = vrot.slane %v1461, 5
      %v1492 = vrot.slane %v1491, 4
      %v1493 = vrot.slane %v1266, 5
      %v1494 = vsel %vm661, %v1492, %v1493
      %v1495 = vrot.slane %v1462, 5
      %v1496 = vrot.slane %v1495, 4
      %v1497 = vrot.slane %v1268, 5
      %v1498 = vsel %vm661, %v1496, %v1497
      %v1499 = vrot.slane %v1463, 5
      %v1500 = vrot.slane %v1499, 4
      %v1501 = vrot.slane %v1270, 5
      %v1502 = vsel %vm661, %v1500, %v1501
      %v1503 = vrot.slane %v1464, 5
      %v1504 = vrot.slane %v1503, 4
      %v1505 = vrot.slane %v1272, 5
      %v1506 = vsel %vm661, %v1504, %v1505
      %v1507 = vrot.slane %v1465, 5
      %v1508 = vrot.slane %v1507, 4
      %v1509 = vrot.slane %v1274, 5
      %v1510 = vsel %vm661, %v1508, %v1509
      %v1511 = vrot.slane %v1466, 5
      %v1512 = vrot.slane %v1511, 4
      %v1513 = vrot.slane %v1276, 5
      %v1514 = vsel %vm661, %v1512, %v1513
      %s1515 = scalar_lea.vmem %s1, 64
      %v1516 = vld [vmem:[%s1515] sm:$0xf]
      %v1517 = vld [vmem:[%s1515 + $0x4] sm:$0xf]
      %v1518 = vunpack.c.l.b16 %v1486
      %v1519 = vunpack.c.l.b16 %v1490
      %v1520 = vunpack.c.l.b16 %v1494
      %v1521 = vunpack.c.l.b16 %v1498
      %v1522 = vunpack.c.l.b16 %v1502
      %v1523 = vunpack.c.l.b16 %v1506
      %v1524 = vunpack.c.l.b16 %v1510
      %v1525 = vunpack.c.l.b16 %v1514
      %v1526 = vpack.c.b16 %v1519, %v1518
      %v1527 = vpack.c.b16 %v1521, %v1520
      %v1528 = vpack.c.b16 %v1523, %v1522
      %v1529 = vpack.c.b16 %v1525, %v1524
      %v1532 = vunpack.c.l.b16 %v1516
      %v1533 = vunpack.c.l.b16 %v1517
      %v1534 = vpack.c.b16 %v1533, %v1532
      %v1537 = vsel %vm526, %v1526, 0
      %v1540 = vsel %vm526, %v1527, 0
      %v1543 = vsel %vm526, %v1528, 0
      %v1546 = vsel %vm526, %v1529, 0
      %1548 = vmatpush.bf16.msra.mxu0 0
      %1549 = vmatpush.bf16.msra.mxu0 0
      %1550 = vmatpush.bf16.msra.mxu0 0
      %1551 = vmatpush.bf16.msra.mxu0 0
      %1552 = vmatpush.bf16.msra.mxu0 0
      %1553 = vmatpush.bf16.msra.mxu0 0
      %1554 = vmatpush.bf16.msra.mxu0 0
      %1555 = vmatpush.bf16.msra.mxu0 %v1534
      %1556 = vmatmul.bf16.gmra.mxu0 %v1537
      %v1557 = vpop.f32.mrf.mxu0
      %v1558 = vadd.f32 0.0, %v1557
      %v1559 = vpop.f32.mrf.mxu0
      %v1560 = vadd.f32 0.0, %v1559
      %1561 = vmatmul.bf16.gmra.mxu0 %v1540
      %v1562 = vpop.f32.mrf.mxu0
      %v1563 = vadd.f32 0.0, %v1562
      %v1564 = vpop.f32.mrf.mxu0
      %v1565 = vadd.f32 0.0, %v1564
      %1566 = vmatmul.bf16.gmra.mxu0 %v1543
      %v1567 = vpop.f32.mrf.mxu0
      %v1568 = vadd.f32 0.0, %v1567
      %v1569 = vpop.f32.mrf.mxu0
      %v1570 = vadd.f32 0.0, %v1569
      %1571 = vmatmul.bf16.gmra.mxu0 %v1546
      %v1572 = vpop.f32.mrf.mxu0
      %v1573 = vadd.f32 0.0, %v1572
      %v1574 = vpop.f32.mrf.mxu0
      %v1575 = vadd.f32 0.0, %v1574
      %1576 = vdwg.mxu0
      %v1577 = vadd.f32 %v1451, %v1558
      %v1578 = vadd.f32 %v1452, %v1560
      %v1579 = vadd.f32 %v1453, %v1563
      %v1580 = vadd.f32 %v1454, %v1565
      %v1581 = vadd.f32 %v1455, %v1568
      %v1582 = vadd.f32 %v1456, %v1570
      %v1583 = vadd.f32 %v1457, %v1573
      %v1584 = vadd.f32 %v1458, %v1575
      %v1586 = vperm.slane %v371, 0
      %v1588 = vadd.f32 %v1577, %v1586
      %v1589 = vadd.f32 %v1578, %v1586
      %v1590 = vadd.f32 %v1579, %v1586
      %v1591 = vadd.f32 %v1580, %v1586
      %v1592 = vadd.f32 %v1581, %v1586
      %v1593 = vadd.f32 %v1582, %v1586
      %v1594 = vadd.f32 %v1583, %v1586
      %v1595 = vadd.f32 %v1584, %v1586
      %v1596 = vpack.c.bf16 %v1588, %v1588
      %v1597 = vpack.c.bf16 %v1589, %v1589
      %v1598 = vpack.c.bf16 %v1590, %v1590
      %v1599 = vpack.c.bf16 %v1591, %v1591
      %v1600 = vpack.c.bf16 %v1592, %v1592
      %v1601 = vpack.c.bf16 %v1593, %v1593
      %v1602 = vpack.c.bf16 %v1594, %v1594
      %v1603 = vpack.c.bf16 %v1595, %v1595
      %1604 = vst [vmem:[%s170] sm:$0xf] %v1596
      %1605 = vst [vmem:[%s170 + $0x4] sm:$0xf] %v1597
      %1606 = vst [vmem:[%s170 + $0x8] sm:$0xf] %v1598
      %1607 = vst [vmem:[%s170 + $0xc] sm:$0xf] %v1599
      %1608 = vst [vmem:[%s170 + $0x10] sm:$0xf] %v1600
      %1609 = vst [vmem:[%s170 + $0x14] sm:$0xf] %v1601
      %1610 = vst [vmem:[%s170 + $0x18] sm:$0xf] %v1602
      %1611 = vst [vmem:[%s170 + $0x1c] sm:$0xf] %v1603
      %p1612 = scmp.lt.s32.totalorder %s14, 1
      %s1613 = scalar_select %p1612, %s14, 1
      %s1614 = smul.addr %s1613, 8
      %s1615 = smul.addr %s1614, 4
      %s1616 = scalar_lea.vmem %s3, %s1615
      // Predicated region
      $region33: #{ssd_head_forward.1} parent=31 // pred_check
        %p1617 = pneg %p100
      $region34: #{ssd_head_forward.1} parent=31 // pred_check_branch
        %1619 = sbr.rel (%p1617) target = $region36
      $region35: #{ssd_head_forward.1} parent=31 // pred_region
        _
      $region36: #{ssd_head_forward.1} parent=31 // pred_fallthru
        _
    $region32: #{ssd_head_forward.1} parent=5 // pred_fallthru
      _
    %p1620 = scmp.le.s32.totalorder 2, %s9
    // Predicated region
    $region37: #{ssd_head_forward.1} parent=5 // pred_check
      %p1621 = pneg %p1620
    $region38: #{ssd_head_forward.1} parent=5 // pred_check_branch
      %1623 = sbr.rel (%p1621) target = $region40
    $region39: #{ssd_head_forward.1} parent=5 // pred_region
      %s1624 = ssub.s32 %s9, 2
      // Predicated region
      $region41: #{ssd_head_forward.1} parent=39 // pred_check
        %p1625 = pneg %p106
      $region42: #{ssd_head_forward.1} parent=39 // pred_check_branch
        %1627 = sbr.rel (%p1625) target = $region44
      $region43: #{ssd_head_forward.1} parent=39 // pred_region
        %p1628 = scmp.lt.s32.totalorder %s15, 1
        %s1629 = scalar_select %p1628, %s15, 1
        %s1630 = smul.addr %s1629, 8
        %s1631 = smul.addr %s1630, 4
        %s1632 = scalar_lea.vmem %s3, %s1631
      $region44: #{ssd_head_forward.1} parent=39 // pred_fallthru
        _
    $region40: #{ssd_head_forward.1} parent=5 // pred_fallthru
      _
  $region6: #{ssd_head_forward.1} parent=0 // loop_footer
    %s13 = sadd.s32 1, %s9
  $region7: #{ssd_head_forward.1} parent=0 // loop_footer_branch
    %8 = sbr.rel target = $region3
  $region8: #{ssd_head_forward.1} parent=0 // loop_exit
    _

</llo_original>
